<compile_context>
chip_gen: v7x
topology: tpu7x:2x2x1
jax: 0.10.0
libtpu: 0.0.40
codegen_flags: <defaults>
</compile_context>

<pallas_src>
import functools

import numpy as np
import jax
import jax.numpy as jnp
from jax import lax
from jax.experimental import pallas as pl
from jax.experimental.pallas import tpu as pltpu


def _round_up(x, m):
    return ((x + m - 1) // m) * m


def _pick_tiles(ni, nt, tile_i, tile_j):
    """Image (sublane) / text (lane) tile sizes.  Invariants: ti multiple of 8
    (and of 64 when >64, so a 64-row chunk divides it), tj multiple of 128."""
    ti = min(tile_i, _round_up(ni, 8))
    if ti > 64:
        ti = _round_up(ti, 64)
    tj = min(tile_j, _round_up(nt, 128))
    # Ensure >=2 grid steps along a "parallel" axis when the problem allows it,
    # so v7x's second TensorCore gets work (no effect on single-TC v5e/v6e).
    if _round_up(ni, ti) // ti == 1 and _round_up(nt, tj) // tj == 1:
        if tj >= 256:
            tj = _round_up(tj // 2, 128)
        elif ti > 64:
            ti = 64
        elif ti >= 16:
            ti = _round_up(ti // 2, 8)
    return ti, tj


def _evidence_kernel(two_d, n_pos, ci, cj, pos_scale, inv_tau,
                     s_lhs_ref, s_rhs_ref, a_ref, b_ref, b2_ref,
                     pos_ref, neg_ref):
    # ---- posE: sign x sign on the MXU (bf16 is exact for {-1,0,+1}) ----------
    # For i2t the operands are (img tile, txt^T tile); for t2i they are
    # (txt tile, img^T tile) so the text-major layout is produced directly.
    pos = lax.dot_general(s_lhs_ref[...], s_rhs_ref[...],
                          (((1,), (0,)), ((), ())),
                          preferred_element_type=jnp.float32)
    pos_ref[...] = jnp.exp(jnp.clip(pos * pos_scale, -15.0, 15.0))

    # ---- negE: pairwise MLP, register-blocked over (ci, cj) chunks ------------
    # A columns / B rows already carry |w2[k]| and 1/sqrt(d); b1 folded into B.
    ti = a_ref.shape[0]
    tj = b_ref.shape[1]
    b2 = b2_ref[0, 0]

    @pl.loop(0, ti // ci)
    def _(ic):
        i0 = pl.multiple_of(ic * ci, ci)
        a_blk = a_ref[pl.ds(i0, ci), :]                       # (ci, 2d)

        @pl.loop(0, tj // cj)
        def _(jc):
            j0 = pl.multiple_of(jc * cj, cj)
            acc = jnp.zeros((ci, cj), jnp.float32)            # vreg-resident
            # k reordered host-side: w2 >= 0 first, then w2 < 0.
            for k in range(n_pos):                            # static unroll
                acc = acc + jnp.maximum(
                    a_blk[:, k:k + 1] + b_ref[pl.ds(k, 1), pl.ds(j0, cj)], 0.0)
            for k in range(n_pos, two_d):
                acc = acc - jnp.maximum(
                    a_blk[:, k:k + 1] + b_ref[pl.ds(k, 1), pl.ds(j0, cj)], 0.0)
            neg = (acc + b2) * inv_tau
            neg_ref[pl.ds(i0, ci), pl.ds(j0, cj)] = jnp.exp(
                jnp.clip(neg, -15.0, 15.0))


def evidence_net_forward(images_hash, texts_hash, params, task_name, tau,
                         tile_i=256, tile_j=512):
    """Matches EvidenceNet.forward(images_hash, texts_hash, task_name)."""
    images_hash = images_hash.astype(jnp.float32)
    texts_hash = texts_hash.astype(jnp.float32)
    ni, d = images_hash.shape
    nt, dt = texts_hash.shape
    two_d = d + dt
    # NB: PyTorch code divides BOTH modalities by sqrt(images_hash.shape[1]).
    inv_sqrt_d = 1.0 / float(np.sqrt(d))

    w1 = params["w1"].astype(jnp.float32)                     # (2d, 2d) torch (out,in)
    b1 = params["b1"].astype(jnp.float32)                     # (2d,)
    w2 = jnp.reshape(params["w2"].astype(jnp.float32), (-1,)) # (2d,)
    b2 = params["b2"].astype(jnp.float32).reshape(1, 1)

    # Fold |w2| (and 1/sqrt(d)) into the first Linear; permute k so w2>=0 first.
    # (Needs concrete param values; this wrapper is not meant to be jitted.)
    w2_np = np.asarray(w2)
    order = np.argsort((w2_np < 0).astype(np.int32), kind="stable")
    n_pos = int(np.sum(w2_np >= 0))
    order_j = jnp.asarray(order)
    absw2 = jnp.abs(w2)[order_j]
    w1p = w1[order_j, :]
    b1p = b1[order_j]

    w1i_t = w1p[:, :d].T * (absw2 * inv_sqrt_d)[None, :]      # (d, 2d)
    w1t_s = w1p[:, d:] * (absw2 * inv_sqrt_d)[:, None]        # (2d, dt)
    b1_s = b1p * absw2                                         # (2d,)

    sgn_img = jnp.sign(images_hash)                            # (ni, d)
    sgn_txt = jnp.sign(texts_hash)                             # (nt, dt)
    # Hoisted per-modality projections (computed once, not per grid tile).
    a_mat = jnp.matmul(sgn_img, w1i_t, precision=lax.Precision.HIGHEST)      # (ni, 2d)
    b_mat = jnp.matmul(w1t_s, sgn_txt.T, precision=lax.Precision.HIGHEST)    # (2d, nt)
    b_mat = b_mat + b1_s[:, None]

    ti, tj = _pick_tiles(ni, nt, tile_i, tile_j)
    ci = min(64, ti)                                           # divides ti by construction
    cj = min(128, tj)                                          # tj is a multiple of 128
    ni_p = _round_up(ni, ti)
    nt_p = _round_up(nt, tj)

    a_p = jnp.pad(a_mat, ((0, ni_p - ni), (0, 0)))
    b_p = jnp.pad(b_mat, ((0, 0), (0, nt_p - nt)))

    if task_name == "i2t":
        s_lhs = jnp.pad(sgn_img.astype(jnp.bfloat16), ((0, ni_p - ni), (0, 0)))
        s_rhs = jnp.pad(sgn_txt.T.astype(jnp.bfloat16), ((0, 0), (0, nt_p - nt)))
        s_lhs_spec = pl.BlockSpec((ti, d), lambda i, j: (i, 0))
        s_rhs_spec = pl.BlockSpec((d, tj), lambda i, j: (0, j))
        pos_spec = pl.BlockSpec((ti, tj), lambda i, j: (i, j))
        pos_shape = (ni_p, nt_p)
    else:
        # t2i: posE = texts_STE @ images_STE.T, written text-major directly.
        s_lhs = jnp.pad(sgn_txt.astype(jnp.bfloat16), ((0, nt_p - nt), (0, 0)))
        s_rhs = jnp.pad(sgn_img.T.astype(jnp.bfloat16), ((0, 0), (0, ni_p - ni)))
        s_lhs_spec = pl.BlockSpec((tj, dt), lambda i, j: (j, 0))
        s_rhs_spec = pl.BlockSpec((dt, ti), lambda i, j: (0, i))
        pos_spec = pl.BlockSpec((tj, ti), lambda i, j: (j, i))
        pos_shape = (nt_p, ni_p)

    kernel = functools.partial(
        _evidence_kernel, two_d, n_pos, ci, cj,
        1.0 / (float(d) * float(tau)),      # pos_scale = (1/sqrt(d))^2 / tau
        1.0 / float(tau))

    smem = pl.BlockSpec(memory_space=pltpu.MemorySpace.SMEM)
    grid = (ni_p // ti, nt_p // tj)

    pos_full, neg_full = pl.pallas_call(
        kernel,
        grid=grid,
        in_specs=[
            s_lhs_spec,                                        # sign tile (bf16)
            s_rhs_spec,                                        # sign tile (bf16)
            pl.BlockSpec((ti, two_d), lambda i, j: (i, 0)),    # A tile (|w2|-scaled)
            pl.BlockSpec((two_d, tj), lambda i, j: (0, j)),    # B tile (+b1 folded)
            smem,                                              # b2 scalar
        ],
        out_specs=(pos_spec,
                   pl.BlockSpec((ti, tj), lambda i, j: (i, j))),
        out_shape=(jax.ShapeDtypeStruct(pos_shape, jnp.float32),
                   jax.ShapeDtypeStruct((ni_p, nt_p), jnp.float32)),
        compiler_params=pltpu.CompilerParams(
            dimension_semantics=("parallel", "parallel"),
            vmem_limit_bytes=32 * 1024 * 1024),
    )(s_lhs, s_rhs, a_p, b_p, b2)

    pos_e = pos_full[:ni, :nt] if task_name == "i2t" else pos_full[:nt, :ni]
    neg_e = neg_full[:ni, :nt]
    # torch quirk preserved: for t2i posE is text-major while negE stays image-major.
    return jnp.stack([pos_e.reshape(-1), neg_e.reshape(-1)], axis=1)


def _init_params(key, bit_dim):
    """Deterministic init of getPosE: Linear(2d,2d) -> ReLU -> Linear(2d,1).
    (imageAcqusition / textAcqusition are unused by forward(), so omitted.)"""
    two_d = 2 * bit_dim
    k1, k2, k3, k4 = jax.random.split(key, 4)
    bound1 = 1.0 / np.sqrt(two_d)
    return {
        "w1": jax.random.uniform(k1, (two_d, two_d), jnp.float32, -bound1, bound1),
        "b1": jax.random.uniform(k2, (two_d,), jnp.float32, -bound1, bound1),
        "w2": jax.random.uniform(k3, (1, two_d), jnp.float32, -bound1, bound1),
        "b2": jax.random.uniform(k4, (1,), jnp.float32, -bound1, bound1),
    }


def _reference_forward(images, texts, params, task_name, tau):
    """Pure-numpy reference mirroring the PyTorch code exactly."""
    images = np.asarray(images, np.float32)
    texts = np.asarray(texts, np.float32)
    d = images.shape[1]
    img = np.sign(images) / np.sqrt(d)
    txt = np.sign(texts) / np.sqrt(d)
    ni, nt = img.shape[0], txt.shape[0]
    composed = np.concatenate(
        [np.repeat(img, nt, axis=0), np.tile(txt, (ni, 1))], axis=1)
    w1, b1, w2, b2 = (np.asarray(params[k]) for k in ("w1", "b1", "w2", "b2"))
    h = np.maximum(composed @ w1.T + b1, 0.0)
    neg = h @ w2.T + b2
    pos = img @ txt.T if task_name == "i2t" else txt @ img.T
    pos = np.exp(np.clip(pos / tau, -15.0, 15.0)).reshape(-1, 1)
    neg = np.exp(np.clip(neg / tau, -15.0, 15.0)).reshape(-1, 1)
    return np.concatenate([pos, neg], axis=1)


if __name__ == "__main__":
    bit_dim = 32
    tau = 0.5
    key = jax.random.PRNGKey(0)

    ok = True
    # (8, 8): single-tile path.  (70, 150): multi-chunk + 2-step grid path.
    for ni, nt in ((8, 8), (70, 150)):
        k_img, k_txt, k_par, key = jax.random.split(key, 4)
        images_hash = jax.random.normal(k_img, (ni, bit_dim), jnp.float32)
        texts_hash = jax.random.normal(k_txt, (nt, bit_dim), jnp.float32)
        params = _init_params(k_par, bit_dim)
        for task in ("i2t", "t2i"):
            out = evidence_net_forward(images_hash, texts_hash, params, task, tau)
            out = jax.block_until_ready(out)
            ref = _reference_forward(images_hash, texts_hash, params, task, tau)
            if out.shape != (ni * nt, 2) or not np.allclose(
                    np.asarray(out), ref, rtol=1e-4, atol=1e-5):
                ok = False

    if ok:
        print("KERNEL_OK")
</pallas_src>

<mosaic_0001>
module attributes {stable_mosaic.version = 11 : i64} {
  func.func @_evidence_kernel(%arg0: i32, %arg1: i32, %arg2: memref<8x32xbf16, #tpu.memory_space<vmem>>, %arg3: memref<32x128xbf16, #tpu.memory_space<vmem>>, %arg4: memref<8x64xf32, #tpu.memory_space<vmem>>, %arg5: memref<64x128xf32, #tpu.memory_space<vmem>>, %arg6: memref<1x1xf32, #tpu.memory_space<smem>>, %arg7: memref<8x128xf32, #tpu.memory_space<vmem>>, %arg8: memref<8x128xf32, #tpu.memory_space<vmem>>) attributes {dimension_semantics = [#tpu.dimension_semantics<parallel>, #tpu.dimension_semantics<parallel>], iteration_bounds = array<i64: 1, 1>, scalar_prefetch = 0 : i64, scratch_operands = 0 : i64, tpu.core_type = #tpu.core_type<tc>, window_params = [{transform_indices = @transform_0, window_bounds = array<i64: 8, 32>}, {transform_indices = @transform_1, window_bounds = array<i64: 32, 128>}, {transform_indices = @transform_2, window_bounds = array<i64: 8, 64>}, {transform_indices = @transform_3, window_bounds = array<i64: 64, 128>}, {transform_indices = @transform_4, window_bounds = array<i64: 1, 1>}, {transform_indices = @transform_5, window_bounds = array<i64: 8, 128>}, {transform_indices = @transform_6, window_bounds = array<i64: 8, 128>}]} {
    %c0 = arith.constant 0 : index
    %c0_0 = arith.constant 0 : index
    %0 = vector.load %arg2[%c0, %c0_0] : memref<8x32xbf16, #tpu.memory_space<vmem>>, vector<8x32xbf16>
    %c0_1 = arith.constant 0 : index
    %c0_2 = arith.constant 0 : index
    %1 = vector.load %arg3[%c0_1, %c0_2] : memref<32x128xbf16, #tpu.memory_space<vmem>>, vector<32x128xbf16>
    %cst = arith.constant dense<0.000000e+00> : vector<8x128xf32>
    %2 = tpu.matmul %0, %1, %cst {dimension_numbers = #tpu.dot_dimension_numbers<[1], [0], [0], [1], [0, 0, 1, 1], [], []>} : vector<8x32xbf16>, vector<32x128xbf16>, vector<8x128xf32> -> vector<8x128xf32>
    %cst_3 = arith.constant 6.250000e-02 : f32
    %3 = vector.broadcast %cst_3 : f32 to vector<8x128xf32>
    %4 = arith.mulf %2, %3 : vector<8x128xf32>
    %cst_4 = arith.constant -1.500000e+01 : f32
    %cst_5 = arith.constant 1.500000e+01 : f32
    %5 = vector.broadcast %cst_4 : f32 to vector<8x128xf32>
    %6 = arith.maximumf %5, %4 : vector<8x128xf32>
    %7 = vector.broadcast %cst_5 : f32 to vector<8x128xf32>
    %8 = arith.minimumf %7, %6 : vector<8x128xf32>
    %9 = math.exp %8 : vector<8x128xf32>
    %c0_6 = arith.constant 0 : index
    %c0_7 = arith.constant 0 : index
    %10 = vector.load %arg7[%c0_6, %c0_7] : memref<8x128xf32, #tpu.memory_space<vmem>>, vector<8x128xf32>
    tpu.vector_store %arg7[%c0_6, %c0_7], %9 {strides = array<i32>} : memref<8x128xf32, #tpu.memory_space<vmem>>, vector<8x128xf32>,
    %c0_8 = arith.constant 0 : index
    %c0_9 = arith.constant 0 : index
    %11 = memref.load %arg6[%c0_8, %c0_9] : memref<1x1xf32, #tpu.memory_space<smem>>
    %c0_i32 = arith.constant 0 : i32
    %c1_i32 = arith.constant 1 : i32
    %12 = arith.muli %c0_i32, %c1_i32 : i32
    %c0_i32_10 = arith.constant 0 : i32
    %13 = arith.addi %c0_i32_10, %12 : i32
    %c8_i32 = arith.constant 8 : i32
    %14 = arith.muli %13, %c8_i32 : i32
    %15 = tpu.assume_multiple %14, 8 : i32
    %16 = arith.index_cast %15 : i32 to index
    %c0_11 = arith.constant 0 : index
    %17 = vector.load %arg4[%16, %c0_11] : memref<8x64xf32, #tpu.memory_space<vmem>>, vector<8x64xf32>
    %c0_i32_12 = arith.constant 0 : i32
    %c1_i32_13 = arith.constant 1 : i32
    %18 = arith.muli %c0_i32_12, %c1_i32_13 : i32
    %c0_i32_14 = arith.constant 0 : i32
    %19 = arith.addi %c0_i32_14, %18 : i32
    %c128_i32 = arith.constant 128 : i32
    %20 = arith.muli %19, %c128_i32 : i32
    %21 = tpu.assume_multiple %20, 128 : i32
    %cst_15 = arith.constant 0.000000e+00 : f32
    %22 = vector.broadcast %cst_15 : f32 to vector<8x128xf32>
    %23 = vector.extract_strided_slice %17 {offsets = [0, 0], sizes = [8, 1], strides = [1, 1]} : vector<8x64xf32> to vector<8x1xf32>
    %c0_16 = arith.constant 0 : index
    %24 = arith.index_cast %21 : i32 to index
    %25 = vector.load %arg5[%c0_16, %24] : memref<64x128xf32, #tpu.memory_space<vmem>>, vector<1x128xf32>
    %26 = vector.broadcast %23 : vector<8x1xf32> to vector<8x128xf32>
    %27 = vector.broadcast %25 : vector<1x128xf32> to vector<8x128xf32>
    %28 = arith.addf %26, %27 : vector<8x128xf32>
    %cst_17 = arith.constant 0.000000e+00 : f32
    %29 = vector.broadcast %cst_17 : f32 to vector<8x128xf32>
    %30 = arith.maximumf %28, %29 : vector<8x128xf32>
    %31 = arith.addf %22, %30 : vector<8x128xf32>
    %32 = vector.extract_strided_slice %17 {offsets = [0, 1], sizes = [8, 1], strides = [1, 1]} : vector<8x64xf32> to vector<8x1xf32>
    %c1 = arith.constant 1 : index
    %33 = arith.index_cast %21 : i32 to index
    %34 = vector.load %arg5[%c1, %33] : memref<64x128xf32, #tpu.memory_space<vmem>>, vector<1x128xf32>
    %35 = vector.broadcast %32 : vector<8x1xf32> to vector<8x128xf32>
    %36 = vector.broadcast %34 : vector<1x128xf32> to vector<8x128xf32>
    %37 = arith.addf %35, %36 : vector<8x128xf32>
    %cst_18 = arith.constant 0.000000e+00 : f32
    %38 = vector.broadcast %cst_18 : f32 to vector<8x128xf32>
    %39 = arith.maximumf %37, %38 : vector<8x128xf32>
    %40 = arith.addf %31, %39 : vector<8x128xf32>
    %41 = vector.extract_strided_slice %17 {offsets = [0, 2], sizes = [8, 1], strides = [1, 1]} : vector<8x64xf32> to vector<8x1xf32>
    %c2 = arith.constant 2 : index
    %42 = arith.index_cast %21 : i32 to index
    %43 = vector.load %arg5[%c2, %42] : memref<64x128xf32, #tpu.memory_space<vmem>>, vector<1x128xf32>
    %44 = vector.broadcast %41 : vector<8x1xf32> to vector<8x128xf32>
    %45 = vector.broadcast %43 : vector<1x128xf32> to vector<8x128xf32>
    %46 = arith.addf %44, %45 : vector<8x128xf32>
    %cst_19 = arith.constant 0.000000e+00 : f32
    %47 = vector.broadcast %cst_19 : f32 to vector<8x128xf32>
    %48 = arith.maximumf %46, %47 : vector<8x128xf32>
    %49 = arith.addf %40, %48 : vector<8x128xf32>
    %50 = vector.extract_strided_slice %17 {offsets = [0, 3], sizes = [8, 1], strides = [1, 1]} : vector<8x64xf32> to vector<8x1xf32>
    %c3 = arith.constant 3 : index
    %51 = arith.index_cast %21 : i32 to index
    %52 = vector.load %arg5[%c3, %51] : memref<64x128xf32, #tpu.memory_space<vmem>>, vector<1x128xf32>
    %53 = vector.broadcast %50 : vector<8x1xf32> to vector<8x128xf32>
    %54 = vector.broadcast %52 : vector<1x128xf32> to vector<8x128xf32>
    %55 = arith.addf %53, %54 : vector<8x128xf32>
    %cst_20 = arith.constant 0.000000e+00 : f32
    %56 = vector.broadcast %cst_20 : f32 to vector<8x128xf32>
    %57 = arith.maximumf %55, %56 : vector<8x128xf32>
    %58 = arith.addf %49, %57 : vector<8x128xf32>
    %59 = vector.extract_strided_slice %17 {offsets = [0, 4], sizes = [8, 1], strides = [1, 1]} : vector<8x64xf32> to vector<8x1xf32>
    %c4 = arith.constant 4 : index
    %60 = arith.index_cast %21 : i32 to index
    %61 = vector.load %arg5[%c4, %60] : memref<64x128xf32, #tpu.memory_space<vmem>>, vector<1x128xf32>
    %62 = vector.broadcast %59 : vector<8x1xf32> to vector<8x128xf32>
    %63 = vector.broadcast %61 : vector<1x128xf32> to vector<8x128xf32>
    %64 = arith.addf %62, %63 : vector<8x128xf32>
    %cst_21 = arith.constant 0.000000e+00 : f32
    %65 = vector.broadcast %cst_21 : f32 to vector<8x128xf32>
    %66 = arith.maximumf %64, %65 : vector<8x128xf32>
    %67 = arith.addf %58, %66 : vector<8x128xf32>
    %68 = vector.extract_strided_slice %17 {offsets = [0, 5], sizes = [8, 1], strides = [1, 1]} : vector<8x64xf32> to vector<8x1xf32>
    %c5 = arith.constant 5 : index
    %69 = arith.index_cast %21 : i32 to index
    %70 = vector.load %arg5[%c5, %69] : memref<64x128xf32, #tpu.memory_space<vmem>>, vector<1x128xf32>
    %71 = vector.broadcast %68 : vector<8x1xf32> to vector<8x128xf32>
    %72 = vector.broadcast %70 : vector<1x128xf32> to vector<8x128xf32>
    %73 = arith.addf %71, %72 : vector<8x128xf32>
    %cst_22 = arith.constant 0.000000e+00 : f32
    %74 = vector.broadcast %cst_22 : f32 to vector<8x128xf32>
    %75 = arith.maximumf %73, %74 : vector<8x128xf32>
    %76 = arith.addf %67, %75 : vector<8x128xf32>
    %77 = vector.extract_strided_slice %17 {offsets = [0, 6], sizes = [8, 1], strides = [1, 1]} : vector<8x64xf32> to vector<8x1xf32>
    %c6 = arith.constant 6 : index
    %78 = arith.index_cast %21 : i32 to index
    %79 = vector.load %arg5[%c6, %78] : memref<64x128xf32, #tpu.memory_space<vmem>>, vector<1x128xf32>
    %80 = vector.broadcast %77 : vector<8x1xf32> to vector<8x128xf32>
    %81 = vector.broadcast %79 : vector<1x128xf32> to vector<8x128xf32>
    %82 = arith.addf %80, %81 : vector<8x128xf32>
    %cst_23 = arith.constant 0.000000e+00 : f32
    %83 = vector.broadcast %cst_23 : f32 to vector<8x128xf32>
    %84 = arith.maximumf %82, %83 : vector<8x128xf32>
    %85 = arith.addf %76, %84 : vector<8x128xf32>
    %86 = vector.extract_strided_slice %17 {offsets = [0, 7], sizes = [8, 1], strides = [1, 1]} : vector<8x64xf32> to vector<8x1xf32>
    %c7 = arith.constant 7 : index
    %87 = arith.index_cast %21 : i32 to index
    %88 = vector.load %arg5[%c7, %87] : memref<64x128xf32, #tpu.memory_space<vmem>>, vector<1x128xf32>
    %89 = vector.broadcast %86 : vector<8x1xf32> to vector<8x128xf32>
    %90 = vector.broadcast %88 : vector<1x128xf32> to vector<8x128xf32>
    %91 = arith.addf %89, %90 : vector<8x128xf32>
    %cst_24 = arith.constant 0.000000e+00 : f32
    %92 = vector.broadcast %cst_24 : f32 to vector<8x128xf32>
    %93 = arith.maximumf %91, %92 : vector<8x128xf32>
    %94 = arith.addf %85, %93 : vector<8x128xf32>
    %95 = vector.extract_strided_slice %17 {offsets = [0, 8], sizes = [8, 1], strides = [1, 1]} : vector<8x64xf32> to vector<8x1xf32>
    %c8 = arith.constant 8 : index
    %96 = arith.index_cast %21 : i32 to index
    %97 = vector.load %arg5[%c8, %96] : memref<64x128xf32, #tpu.memory_space<vmem>>, vector<1x128xf32>
    %98 = vector.broadcast %95 : vector<8x1xf32> to vector<8x128xf32>
    %99 = vector.broadcast %97 : vector<1x128xf32> to vector<8x128xf32>
    %100 = arith.addf %98, %99 : vector<8x128xf32>
    %cst_25 = arith.constant 0.000000e+00 : f32
    %101 = vector.broadcast %cst_25 : f32 to vector<8x128xf32>
    %102 = arith.maximumf %100, %101 : vector<8x128xf32>
    %103 = arith.addf %94, %102 : vector<8x128xf32>
    %104 = vector.extract_strided_slice %17 {offsets = [0, 9], sizes = [8, 1], strides = [1, 1]} : vector<8x64xf32> to vector<8x1xf32>
    %c9 = arith.constant 9 : index
    %105 = arith.index_cast %21 : i32 to index
    %106 = vector.load %arg5[%c9, %105] : memref<64x128xf32, #tpu.memory_space<vmem>>, vector<1x128xf32>
    %107 = vector.broadcast %104 : vector<8x1xf32> to vector<8x128xf32>
    %108 = vector.broadcast %106 : vector<1x128xf32> to vector<8x128xf32>
    %109 = arith.addf %107, %108 : vector<8x128xf32>
    %cst_26 = arith.constant 0.000000e+00 : f32
    %110 = vector.broadcast %cst_26 : f32 to vector<8x128xf32>
    %111 = arith.maximumf %109, %110 : vector<8x128xf32>
    %112 = arith.addf %103, %111 : vector<8x128xf32>
    %113 = vector.extract_strided_slice %17 {offsets = [0, 10], sizes = [8, 1], strides = [1, 1]} : vector<8x64xf32> to vector<8x1xf32>
    %c10 = arith.constant 10 : index
    %114 = arith.index_cast %21 : i32 to index
    %115 = vector.load %arg5[%c10, %114] : memref<64x128xf32, #tpu.memory_space<vmem>>, vector<1x128xf32>
    %116 = vector.broadcast %113 : vector<8x1xf32> to vector<8x128xf32>
    %117 = vector.broadcast %115 : vector<1x128xf32> to vector<8x128xf32>
    %118 = arith.addf %116, %117 : vector<8x128xf32>
    %cst_27 = arith.constant 0.000000e+00 : f32
    %119 = vector.broadcast %cst_27 : f32 to vector<8x128xf32>
    %120 = arith.maximumf %118, %119 : vector<8x128xf32>
    %121 = arith.addf %112, %120 : vector<8x128xf32>
    %122 = vector.extract_strided_slice %17 {offsets = [0, 11], sizes = [8, 1], strides = [1, 1]} : vector<8x64xf32> to vector<8x1xf32>
    %c11 = arith.constant 11 : index
    %123 = arith.index_cast %21 : i32 to index
    %124 = vector.load %arg5[%c11, %123] : memref<64x128xf32, #tpu.memory_space<vmem>>, vector<1x128xf32>
    %125 = vector.broadcast %122 : vector<8x1xf32> to vector<8x128xf32>
    %126 = vector.broadcast %124 : vector<1x128xf32> to vector<8x128xf32>
    %127 = arith.addf %125, %126 : vector<8x128xf32>
    %cst_28 = arith.constant 0.000000e+00 : f32
    %128 = vector.broadcast %cst_28 : f32 to vector<8x128xf32>
    %129 = arith.maximumf %127, %128 : vector<8x128xf32>
    %130 = arith.addf %121, %129 : vector<8x128xf32>
    %131 = vector.extract_strided_slice %17 {offsets = [0, 12], sizes = [8, 1], strides = [1, 1]} : vector<8x64xf32> to vector<8x1xf32>
    %c12 = arith.constant 12 : index
    %132 = arith.index_cast %21 : i32 to index
    %133 = vector.load %arg5[%c12, %132] : memref<64x128xf32, #tpu.memory_space<vmem>>, vector<1x128xf32>
    %134 = vector.broadcast %131 : vector<8x1xf32> to vector<8x128xf32>
    %135 = vector.broadcast %133 : vector<1x128xf32> to vector<8x128xf32>
    %136 = arith.addf %134, %135 : vector<8x128xf32>
    %cst_29 = arith.constant 0.000000e+00 : f32
    %137 = vector.broadcast %cst_29 : f32 to vector<8x128xf32>
    %138 = arith.maximumf %136, %137 : vector<8x128xf32>
    %139 = arith.addf %130, %138 : vector<8x128xf32>
    %140 = vector.extract_strided_slice %17 {offsets = [0, 13], sizes = [8, 1], strides = [1, 1]} : vector<8x64xf32> to vector<8x1xf32>
    %c13 = arith.constant 13 : index
    %141 = arith.index_cast %21 : i32 to index
    %142 = vector.load %arg5[%c13, %141] : memref<64x128xf32, #tpu.memory_space<vmem>>, vector<1x128xf32>
    %143 = vector.broadcast %140 : vector<8x1xf32> to vector<8x128xf32>
    %144 = vector.broadcast %142 : vector<1x128xf32> to vector<8x128xf32>
    %145 = arith.addf %143, %144 : vector<8x128xf32>
    %cst_30 = arith.constant 0.000000e+00 : f32
    %146 = vector.broadcast %cst_30 : f32 to vector<8x128xf32>
    %147 = arith.maximumf %145, %146 : vector<8x128xf32>
    %148 = arith.addf %139, %147 : vector<8x128xf32>
    %149 = vector.extract_strided_slice %17 {offsets = [0, 14], sizes = [8, 1], strides = [1, 1]} : vector<8x64xf32> to vector<8x1xf32>
    %c14 = arith.constant 14 : index
    %150 = arith.index_cast %21 : i32 to index
    %151 = vector.load %arg5[%c14, %150] : memref<64x128xf32, #tpu.memory_space<vmem>>, vector<1x128xf32>
    %152 = vector.broadcast %149 : vector<8x1xf32> to vector<8x128xf32>
    %153 = vector.broadcast %151 : vector<1x128xf32> to vector<8x128xf32>
    %154 = arith.addf %152, %153 : vector<8x128xf32>
    %cst_31 = arith.constant 0.000000e+00 : f32
    %155 = vector.broadcast %cst_31 : f32 to vector<8x128xf32>
    %156 = arith.maximumf %154, %155 : vector<8x128xf32>
    %157 = arith.addf %148, %156 : vector<8x128xf32>
    %158 = vector.extract_strided_slice %17 {offsets = [0, 15], sizes = [8, 1], strides = [1, 1]} : vector<8x64xf32> to vector<8x1xf32>
    %c15 = arith.constant 15 : index
    %159 = arith.index_cast %21 : i32 to index
    %160 = vector.load %arg5[%c15, %159] : memref<64x128xf32, #tpu.memory_space<vmem>>, vector<1x128xf32>
    %161 = vector.broadcast %158 : vector<8x1xf32> to vector<8x128xf32>
    %162 = vector.broadcast %160 : vector<1x128xf32> to vector<8x128xf32>
    %163 = arith.addf %161, %162 : vector<8x128xf32>
    %cst_32 = arith.constant 0.000000e+00 : f32
    %164 = vector.broadcast %cst_32 : f32 to vector<8x128xf32>
    %165 = arith.maximumf %163, %164 : vector<8x128xf32>
    %166 = arith.addf %157, %165 : vector<8x128xf32>
    %167 = vector.extract_strided_slice %17 {offsets = [0, 16], sizes = [8, 1], strides = [1, 1]} : vector<8x64xf32> to vector<8x1xf32>
    %c16 = arith.constant 16 : index
    %168 = arith.index_cast %21 : i32 to index
    %169 = vector.load %arg5[%c16, %168] : memref<64x128xf32, #tpu.memory_space<vmem>>, vector<1x128xf32>
    %170 = vector.broadcast %167 : vector<8x1xf32> to vector<8x128xf32>
    %171 = vector.broadcast %169 : vector<1x128xf32> to vector<8x128xf32>
    %172 = arith.addf %170, %171 : vector<8x128xf32>
    %cst_33 = arith.constant 0.000000e+00 : f32
    %173 = vector.broadcast %cst_33 : f32 to vector<8x128xf32>
    %174 = arith.maximumf %172, %173 : vector<8x128xf32>
    %175 = arith.addf %166, %174 : vector<8x128xf32>
    %176 = vector.extract_strided_slice %17 {offsets = [0, 17], sizes = [8, 1], strides = [1, 1]} : vector<8x64xf32> to vector<8x1xf32>
    %c17 = arith.constant 17 : index
    %177 = arith.index_cast %21 : i32 to index
    %178 = vector.load %arg5[%c17, %177] : memref<64x128xf32, #tpu.memory_space<vmem>>, vector<1x128xf32>
    %179 = vector.broadcast %176 : vector<8x1xf32> to vector<8x128xf32>
    %180 = vector.broadcast %178 : vector<1x128xf32> to vector<8x128xf32>
    %181 = arith.addf %179, %180 : vector<8x128xf32>
    %cst_34 = arith.constant 0.000000e+00 : f32
    %182 = vector.broadcast %cst_34 : f32 to vector<8x128xf32>
    %183 = arith.maximumf %181, %182 : vector<8x128xf32>
    %184 = arith.addf %175, %183 : vector<8x128xf32>
    %185 = vector.extract_strided_slice %17 {offsets = [0, 18], sizes = [8, 1], strides = [1, 1]} : vector<8x64xf32> to vector<8x1xf32>
    %c18 = arith.constant 18 : index
    %186 = arith.index_cast %21 : i32 to index
    %187 = vector.load %arg5[%c18, %186] : memref<64x128xf32, #tpu.memory_space<vmem>>, vector<1x128xf32>
    %188 = vector.broadcast %185 : vector<8x1xf32> to vector<8x128xf32>
    %189 = vector.broadcast %187 : vector<1x128xf32> to vector<8x128xf32>
    %190 = arith.addf %188, %189 : vector<8x128xf32>
    %cst_35 = arith.constant 0.000000e+00 : f32
    %191 = vector.broadcast %cst_35 : f32 to vector<8x128xf32>
    %192 = arith.maximumf %190, %191 : vector<8x128xf32>
    %193 = arith.addf %184, %192 : vector<8x128xf32>
    %194 = vector.extract_strided_slice %17 {offsets = [0, 19], sizes = [8, 1], strides = [1, 1]} : vector<8x64xf32> to vector<8x1xf32>
    %c19 = arith.constant 19 : index
    %195 = arith.index_cast %21 : i32 to index
    %196 = vector.load %arg5[%c19, %195] : memref<64x128xf32, #tpu.memory_space<vmem>>, vector<1x128xf32>
    %197 = vector.broadcast %194 : vector<8x1xf32> to vector<8x128xf32>
    %198 = vector.broadcast %196 : vector<1x128xf32> to vector<8x128xf32>
    %199 = arith.addf %197, %198 : vector<8x128xf32>
    %cst_36 = arith.constant 0.000000e+00 : f32
    %200 = vector.broadcast %cst_36 : f32 to vector<8x128xf32>
    %201 = arith.maximumf %199, %200 : vector<8x128xf32>
    %202 = arith.addf %193, %201 : vector<8x128xf32>
    %203 = vector.extract_strided_slice %17 {offsets = [0, 20], sizes = [8, 1], strides = [1, 1]} : vector<8x64xf32> to vector<8x1xf32>
    %c20 = arith.constant 20 : index
    %204 = arith.index_cast %21 : i32 to index
    %205 = vector.load %arg5[%c20, %204] : memref<64x128xf32, #tpu.memory_space<vmem>>, vector<1x128xf32>
    %206 = vector.broadcast %203 : vector<8x1xf32> to vector<8x128xf32>
    %207 = vector.broadcast %205 : vector<1x128xf32> to vector<8x128xf32>
    %208 = arith.addf %206, %207 : vector<8x128xf32>
    %cst_37 = arith.constant 0.000000e+00 : f32
    %209 = vector.broadcast %cst_37 : f32 to vector<8x128xf32>
    %210 = arith.maximumf %208, %209 : vector<8x128xf32>
    %211 = arith.addf %202, %210 : vector<8x128xf32>
    %212 = vector.extract_strided_slice %17 {offsets = [0, 21], sizes = [8, 1], strides = [1, 1]} : vector<8x64xf32> to vector<8x1xf32>
    %c21 = arith.constant 21 : index
    %213 = arith.index_cast %21 : i32 to index
    %214 = vector.load %arg5[%c21, %213] : memref<64x128xf32, #tpu.memory_space<vmem>>, vector<1x128xf32>
    %215 = vector.broadcast %212 : vector<8x1xf32> to vector<8x128xf32>
    %216 = vector.broadcast %214 : vector<1x128xf32> to vector<8x128xf32>
    %217 = arith.addf %215, %216 : vector<8x128xf32>
    %cst_38 = arith.constant 0.000000e+00 : f32
    %218 = vector.broadcast %cst_38 : f32 to vector<8x128xf32>
    %219 = arith.maximumf %217, %218 : vector<8x128xf32>
    %220 = arith.addf %211, %219 : vector<8x128xf32>
    %221 = vector.extract_strided_slice %17 {offsets = [0, 22], sizes = [8, 1], strides = [1, 1]} : vector<8x64xf32> to vector<8x1xf32>
    %c22 = arith.constant 22 : index
    %222 = arith.index_cast %21 : i32 to index
    %223 = vector.load %arg5[%c22, %222] : memref<64x128xf32, #tpu.memory_space<vmem>>, vector<1x128xf32>
    %224 = vector.broadcast %221 : vector<8x1xf32> to vector<8x128xf32>
    %225 = vector.broadcast %223 : vector<1x128xf32> to vector<8x128xf32>
    %226 = arith.addf %224, %225 : vector<8x128xf32>
    %cst_39 = arith.constant 0.000000e+00 : f32
    %227 = vector.broadcast %cst_39 : f32 to vector<8x128xf32>
    %228 = arith.maximumf %226, %227 : vector<8x128xf32>
    %229 = arith.addf %220, %228 : vector<8x128xf32>
    %230 = vector.extract_strided_slice %17 {offsets = [0, 23], sizes = [8, 1], strides = [1, 1]} : vector<8x64xf32> to vector<8x1xf32>
    %c23 = arith.constant 23 : index
    %231 = arith.index_cast %21 : i32 to index
    %232 = vector.load %arg5[%c23, %231] : memref<64x128xf32, #tpu.memory_space<vmem>>, vector<1x128xf32>
    %233 = vector.broadcast %230 : vector<8x1xf32> to vector<8x128xf32>
    %234 = vector.broadcast %232 : vector<1x128xf32> to vector<8x128xf32>
    %235 = arith.addf %233, %234 : vector<8x128xf32>
    %cst_40 = arith.constant 0.000000e+00 : f32
    %236 = vector.broadcast %cst_40 : f32 to vector<8x128xf32>
    %237 = arith.maximumf %235, %236 : vector<8x128xf32>
    %238 = arith.addf %229, %237 : vector<8x128xf32>
    %239 = vector.extract_strided_slice %17 {offsets = [0, 24], sizes = [8, 1], strides = [1, 1]} : vector<8x64xf32> to vector<8x1xf32>
    %c24 = arith.constant 24 : index
    %240 = arith.index_cast %21 : i32 to index
    %241 = vector.load %arg5[%c24, %240] : memref<64x128xf32, #tpu.memory_space<vmem>>, vector<1x128xf32>
    %242 = vector.broadcast %239 : vector<8x1xf32> to vector<8x128xf32>
    %243 = vector.broadcast %241 : vector<1x128xf32> to vector<8x128xf32>
    %244 = arith.addf %242, %243 : vector<8x128xf32>
    %cst_41 = arith.constant 0.000000e+00 : f32
    %245 = vector.broadcast %cst_41 : f32 to vector<8x128xf32>
    %246 = arith.maximumf %244, %245 : vector<8x128xf32>
    %247 = arith.addf %238, %246 : vector<8x128xf32>
    %248 = vector.extract_strided_slice %17 {offsets = [0, 25], sizes = [8, 1], strides = [1, 1]} : vector<8x64xf32> to vector<8x1xf32>
    %c25 = arith.constant 25 : index
    %249 = arith.index_cast %21 : i32 to index
    %250 = vector.load %arg5[%c25, %249] : memref<64x128xf32, #tpu.memory_space<vmem>>, vector<1x128xf32>
    %251 = vector.broadcast %248 : vector<8x1xf32> to vector<8x128xf32>
    %252 = vector.broadcast %250 : vector<1x128xf32> to vector<8x128xf32>
    %253 = arith.addf %251, %252 : vector<8x128xf32>
    %cst_42 = arith.constant 0.000000e+00 : f32
    %254 = vector.broadcast %cst_42 : f32 to vector<8x128xf32>
    %255 = arith.maximumf %253, %254 : vector<8x128xf32>
    %256 = arith.addf %247, %255 : vector<8x128xf32>
    %257 = vector.extract_strided_slice %17 {offsets = [0, 26], sizes = [8, 1], strides = [1, 1]} : vector<8x64xf32> to vector<8x1xf32>
    %c26 = arith.constant 26 : index
    %258 = arith.index_cast %21 : i32 to index
    %259 = vector.load %arg5[%c26, %258] : memref<64x128xf32, #tpu.memory_space<vmem>>, vector<1x128xf32>
    %260 = vector.broadcast %257 : vector<8x1xf32> to vector<8x128xf32>
    %261 = vector.broadcast %259 : vector<1x128xf32> to vector<8x128xf32>
    %262 = arith.addf %260, %261 : vector<8x128xf32>
    %cst_43 = arith.constant 0.000000e+00 : f32
    %263 = vector.broadcast %cst_43 : f32 to vector<8x128xf32>
    %264 = arith.maximumf %262, %263 : vector<8x128xf32>
    %265 = arith.addf %256, %264 : vector<8x128xf32>
    %266 = vector.extract_strided_slice %17 {offsets = [0, 27], sizes = [8, 1], strides = [1, 1]} : vector<8x64xf32> to vector<8x1xf32>
    %c27 = arith.constant 27 : index
    %267 = arith.index_cast %21 : i32 to index
    %268 = vector.load %arg5[%c27, %267] : memref<64x128xf32, #tpu.memory_space<vmem>>, vector<1x128xf32>
    %269 = vector.broadcast %266 : vector<8x1xf32> to vector<8x128xf32>
    %270 = vector.broadcast %268 : vector<1x128xf32> to vector<8x128xf32>
    %271 = arith.addf %269, %270 : vector<8x128xf32>
    %cst_44 = arith.constant 0.000000e+00 : f32
    %272 = vector.broadcast %cst_44 : f32 to vector<8x128xf32>
    %273 = arith.maximumf %271, %272 : vector<8x128xf32>
    %274 = arith.subf %265, %273 : vector<8x128xf32>
    %275 = vector.extract_strided_slice %17 {offsets = [0, 28], sizes = [8, 1], strides = [1, 1]} : vector<8x64xf32> to vector<8x1xf32>
    %c28 = arith.constant 28 : index
    %276 = arith.index_cast %21 : i32 to index
    %277 = vector.load %arg5[%c28, %276] : memref<64x128xf32, #tpu.memory_space<vmem>>, vector<1x128xf32>
    %278 = vector.broadcast %275 : vector<8x1xf32> to vector<8x128xf32>
    %279 = vector.broadcast %277 : vector<1x128xf32> to vector<8x128xf32>
    %280 = arith.addf %278, %279 : vector<8x128xf32>
    %cst_45 = arith.constant 0.000000e+00 : f32
    %281 = vector.broadcast %cst_45 : f32 to vector<8x128xf32>
    %282 = arith.maximumf %280, %281 : vector<8x128xf32>
    %283 = arith.subf %274, %282 : vector<8x128xf32>
    %284 = vector.extract_strided_slice %17 {offsets = [0, 29], sizes = [8, 1], strides = [1, 1]} : vector<8x64xf32> to vector<8x1xf32>
    %c29 = arith.constant 29 : index
    %285 = arith.index_cast %21 : i32 to index
    %286 = vector.load %arg5[%c29, %285] : memref<64x128xf32, #tpu.memory_space<vmem>>, vector<1x128xf32>
    %287 = vector.broadcast %284 : vector<8x1xf32> to vector<8x128xf32>
    %288 = vector.broadcast %286 : vector<1x128xf32> to vector<8x128xf32>
    %289 = arith.addf %287, %288 : vector<8x128xf32>
    %cst_46 = arith.constant 0.000000e+00 : f32
    %290 = vector.broadcast %cst_46 : f32 to vector<8x128xf32>
    %291 = arith.maximumf %289, %290 : vector<8x128xf32>
    %292 = arith.subf %283, %291 : vector<8x128xf32>
    %293 = vector.extract_strided_slice %17 {offsets = [0, 30], sizes = [8, 1], strides = [1, 1]} : vector<8x64xf32> to vector<8x1xf32>
    %c30 = arith.constant 30 : index
    %294 = arith.index_cast %21 : i32 to index
    %295 = vector.load %arg5[%c30, %294] : memref<64x128xf32, #tpu.memory_space<vmem>>, vector<1x128xf32>
    %296 = vector.broadcast %293 : vector<8x1xf32> to vector<8x128xf32>
    %297 = vector.broadcast %295 : vector<1x128xf32> to vector<8x128xf32>
    %298 = arith.addf %296, %297 : vector<8x128xf32>
    %cst_47 = arith.constant 0.000000e+00 : f32
    %299 = vector.broadcast %cst_47 : f32 to vector<8x128xf32>
    %300 = arith.maximumf %298, %299 : vector<8x128xf32>
    %301 = arith.subf %292, %300 : vector<8x128xf32>
    %302 = vector.extract_strided_slice %17 {offsets = [0, 31], sizes = [8, 1], strides = [1, 1]} : vector<8x64xf32> to vector<8x1xf32>
    %c31 = arith.constant 31 : index
    %303 = arith.index_cast %21 : i32 to index
    %304 = vector.load %arg5[%c31, %303] : memref<64x128xf32, #tpu.memory_space<vmem>>, vector<1x128xf32>
    %305 = vector.broadcast %302 : vector<8x1xf32> to vector<8x128xf32>
    %306 = vector.broadcast %304 : vector<1x128xf32> to vector<8x128xf32>
    %307 = arith.addf %305, %306 : vector<8x128xf32>
    %cst_48 = arith.constant 0.000000e+00 : f32
    %308 = vector.broadcast %cst_48 : f32 to vector<8x128xf32>
    %309 = arith.maximumf %307, %308 : vector<8x128xf32>
    %310 = arith.subf %301, %309 : vector<8x128xf32>
    %311 = vector.extract_strided_slice %17 {offsets = [0, 32], sizes = [8, 1], strides = [1, 1]} : vector<8x64xf32> to vector<8x1xf32>
    %c32 = arith.constant 32 : index
    %312 = arith.index_cast %21 : i32 to index
    %313 = vector.load %arg5[%c32, %312] : memref<64x128xf32, #tpu.memory_space<vmem>>, vector<1x128xf32>
    %314 = vector.broadcast %311 : vector<8x1xf32> to vector<8x128xf32>
    %315 = vector.broadcast %313 : vector<1x128xf32> to vector<8x128xf32>
    %316 = arith.addf %314, %315 : vector<8x128xf32>
    %cst_49 = arith.constant 0.000000e+00 : f32
    %317 = vector.broadcast %cst_49 : f32 to vector<8x128xf32>
    %318 = arith.maximumf %316, %317 : vector<8x128xf32>
    %319 = arith.subf %310, %318 : vector<8x128xf32>
    %320 = vector.extract_strided_slice %17 {offsets = [0, 33], sizes = [8, 1], strides = [1, 1]} : vector<8x64xf32> to vector<8x1xf32>
    %c33 = arith.constant 33 : index
    %321 = arith.index_cast %21 : i32 to index
    %322 = vector.load %arg5[%c33, %321] : memref<64x128xf32, #tpu.memory_space<vmem>>, vector<1x128xf32>
    %323 = vector.broadcast %320 : vector<8x1xf32> to vector<8x128xf32>
    %324 = vector.broadcast %322 : vector<1x128xf32> to vector<8x128xf32>
    %325 = arith.addf %323, %324 : vector<8x128xf32>
    %cst_50 = arith.constant 0.000000e+00 : f32
    %326 = vector.broadcast %cst_50 : f32 to vector<8x128xf32>
    %327 = arith.maximumf %325, %326 : vector<8x128xf32>
    %328 = arith.subf %319, %327 : vector<8x128xf32>
    %329 = vector.extract_strided_slice %17 {offsets = [0, 34], sizes = [8, 1], strides = [1, 1]} : vector<8x64xf32> to vector<8x1xf32>
    %c34 = arith.constant 34 : index
    %330 = arith.index_cast %21 : i32 to index
    %331 = vector.load %arg5[%c34, %330] : memref<64x128xf32, #tpu.memory_space<vmem>>, vector<1x128xf32>
    %332 = vector.broadcast %329 : vector<8x1xf32> to vector<8x128xf32>
    %333 = vector.broadcast %331 : vector<1x128xf32> to vector<8x128xf32>
    %334 = arith.addf %332, %333 : vector<8x128xf32>
    %cst_51 = arith.constant 0.000000e+00 : f32
    %335 = vector.broadcast %cst_51 : f32 to vector<8x128xf32>
    %336 = arith.maximumf %334, %335 : vector<8x128xf32>
    %337 = arith.subf %328, %336 : vector<8x128xf32>
    %338 = vector.extract_strided_slice %17 {offsets = [0, 35], sizes = [8, 1], strides = [1, 1]} : vector<8x64xf32> to vector<8x1xf32>
    %c35 = arith.constant 35 : index
    %339 = arith.index_cast %21 : i32 to index
    %340 = vector.load %arg5[%c35, %339] : memref<64x128xf32, #tpu.memory_space<vmem>>, vector<1x128xf32>
    %341 = vector.broadcast %338 : vector<8x1xf32> to vector<8x128xf32>
    %342 = vector.broadcast %340 : vector<1x128xf32> to vector<8x128xf32>
    %343 = arith.addf %341, %342 : vector<8x128xf32>
    %cst_52 = arith.constant 0.000000e+00 : f32
    %344 = vector.broadcast %cst_52 : f32 to vector<8x128xf32>
    %345 = arith.maximumf %343, %344 : vector<8x128xf32>
    %346 = arith.subf %337, %345 : vector<8x128xf32>
    %347 = vector.extract_strided_slice %17 {offsets = [0, 36], sizes = [8, 1], strides = [1, 1]} : vector<8x64xf32> to vector<8x1xf32>
    %c36 = arith.constant 36 : index
    %348 = arith.index_cast %21 : i32 to index
    %349 = vector.load %arg5[%c36, %348] : memref<64x128xf32, #tpu.memory_space<vmem>>, vector<1x128xf32>
    %350 = vector.broadcast %347 : vector<8x1xf32> to vector<8x128xf32>
    %351 = vector.broadcast %349 : vector<1x128xf32> to vector<8x128xf32>
    %352 = arith.addf %350, %351 : vector<8x128xf32>
    %cst_53 = arith.constant 0.000000e+00 : f32
    %353 = vector.broadcast %cst_53 : f32 to vector<8x128xf32>
    %354 = arith.maximumf %352, %353 : vector<8x128xf32>
    %355 = arith.subf %346, %354 : vector<8x128xf32>
    %356 = vector.extract_strided_slice %17 {offsets = [0, 37], sizes = [8, 1], strides = [1, 1]} : vector<8x64xf32> to vector<8x1xf32>
    %c37 = arith.constant 37 : index
    %357 = arith.index_cast %21 : i32 to index
    %358 = vector.load %arg5[%c37, %357] : memref<64x128xf32, #tpu.memory_space<vmem>>, vector<1x128xf32>
    %359 = vector.broadcast %356 : vector<8x1xf32> to vector<8x128xf32>
    %360 = vector.broadcast %358 : vector<1x128xf32> to vector<8x128xf32>
    %361 = arith.addf %359, %360 : vector<8x128xf32>
    %cst_54 = arith.constant 0.000000e+00 : f32
    %362 = vector.broadcast %cst_54 : f32 to vector<8x128xf32>
    %363 = arith.maximumf %361, %362 : vector<8x128xf32>
    %364 = arith.subf %355, %363 : vector<8x128xf32>
    %365 = vector.extract_strided_slice %17 {offsets = [0, 38], sizes = [8, 1], strides = [1, 1]} : vector<8x64xf32> to vector<8x1xf32>
    %c38 = arith.constant 38 : index
    %366 = arith.index_cast %21 : i32 to index
    %367 = vector.load %arg5[%c38, %366] : memref<64x128xf32, #tpu.memory_space<vmem>>, vector<1x128xf32>
    %368 = vector.broadcast %365 : vector<8x1xf32> to vector<8x128xf32>
    %369 = vector.broadcast %367 : vector<1x128xf32> to vector<8x128xf32>
    %370 = arith.addf %368, %369 : vector<8x128xf32>
    %cst_55 = arith.constant 0.000000e+00 : f32
    %371 = vector.broadcast %cst_55 : f32 to vector<8x128xf32>
    %372 = arith.maximumf %370, %371 : vector<8x128xf32>
    %373 = arith.subf %364, %372 : vector<8x128xf32>
    %374 = vector.extract_strided_slice %17 {offsets = [0, 39], sizes = [8, 1], strides = [1, 1]} : vector<8x64xf32> to vector<8x1xf32>
    %c39 = arith.constant 39 : index
    %375 = arith.index_cast %21 : i32 to index
    %376 = vector.load %arg5[%c39, %375] : memref<64x128xf32, #tpu.memory_space<vmem>>, vector<1x128xf32>
    %377 = vector.broadcast %374 : vector<8x1xf32> to vector<8x128xf32>
    %378 = vector.broadcast %376 : vector<1x128xf32> to vector<8x128xf32>
    %379 = arith.addf %377, %378 : vector<8x128xf32>
    %cst_56 = arith.constant 0.000000e+00 : f32
    %380 = vector.broadcast %cst_56 : f32 to vector<8x128xf32>
    %381 = arith.maximumf %379, %380 : vector<8x128xf32>
    %382 = arith.subf %373, %381 : vector<8x128xf32>
    %383 = vector.extract_strided_slice %17 {offsets = [0, 40], sizes = [8, 1], strides = [1, 1]} : vector<8x64xf32> to vector<8x1xf32>
    %c40 = arith.constant 40 : index
    %384 = arith.index_cast %21 : i32 to index
    %385 = vector.load %arg5[%c40, %384] : memref<64x128xf32, #tpu.memory_space<vmem>>, vector<1x128xf32>
    %386 = vector.broadcast %383 : vector<8x1xf32> to vector<8x128xf32>
    %387 = vector.broadcast %385 : vector<1x128xf32> to vector<8x128xf32>
    %388 = arith.addf %386, %387 : vector<8x128xf32>
    %cst_57 = arith.constant 0.000000e+00 : f32
    %389 = vector.broadcast %cst_57 : f32 to vector<8x128xf32>
    %390 = arith.maximumf %388, %389 : vector<8x128xf32>
    %391 = arith.subf %382, %390 : vector<8x128xf32>
    %392 = vector.extract_strided_slice %17 {offsets = [0, 41], sizes = [8, 1], strides = [1, 1]} : vector<8x64xf32> to vector<8x1xf32>
    %c41 = arith.constant 41 : index
    %393 = arith.index_cast %21 : i32 to index
    %394 = vector.load %arg5[%c41, %393] : memref<64x128xf32, #tpu.memory_space<vmem>>, vector<1x128xf32>
    %395 = vector.broadcast %392 : vector<8x1xf32> to vector<8x128xf32>
    %396 = vector.broadcast %394 : vector<1x128xf32> to vector<8x128xf32>
    %397 = arith.addf %395, %396 : vector<8x128xf32>
    %cst_58 = arith.constant 0.000000e+00 : f32
    %398 = vector.broadcast %cst_58 : f32 to vector<8x128xf32>
    %399 = arith.maximumf %397, %398 : vector<8x128xf32>
    %400 = arith.subf %391, %399 : vector<8x128xf32>
    %401 = vector.extract_strided_slice %17 {offsets = [0, 42], sizes = [8, 1], strides = [1, 1]} : vector<8x64xf32> to vector<8x1xf32>
    %c42 = arith.constant 42 : index
    %402 = arith.index_cast %21 : i32 to index
    %403 = vector.load %arg5[%c42, %402] : memref<64x128xf32, #tpu.memory_space<vmem>>, vector<1x128xf32>
    %404 = vector.broadcast %401 : vector<8x1xf32> to vector<8x128xf32>
    %405 = vector.broadcast %403 : vector<1x128xf32> to vector<8x128xf32>
    %406 = arith.addf %404, %405 : vector<8x128xf32>
    %cst_59 = arith.constant 0.000000e+00 : f32
    %407 = vector.broadcast %cst_59 : f32 to vector<8x128xf32>
    %408 = arith.maximumf %406, %407 : vector<8x128xf32>
    %409 = arith.subf %400, %408 : vector<8x128xf32>
    %410 = vector.extract_strided_slice %17 {offsets = [0, 43], sizes = [8, 1], strides = [1, 1]} : vector<8x64xf32> to vector<8x1xf32>
    %c43 = arith.constant 43 : index
    %411 = arith.index_cast %21 : i32 to index
    %412 = vector.load %arg5[%c43, %411] : memref<64x128xf32, #tpu.memory_space<vmem>>, vector<1x128xf32>
    %413 = vector.broadcast %410 : vector<8x1xf32> to vector<8x128xf32>
    %414 = vector.broadcast %412 : vector<1x128xf32> to vector<8x128xf32>
    %415 = arith.addf %413, %414 : vector<8x128xf32>
    %cst_60 = arith.constant 0.000000e+00 : f32
    %416 = vector.broadcast %cst_60 : f32 to vector<8x128xf32>
    %417 = arith.maximumf %415, %416 : vector<8x128xf32>
    %418 = arith.subf %409, %417 : vector<8x128xf32>
    %419 = vector.extract_strided_slice %17 {offsets = [0, 44], sizes = [8, 1], strides = [1, 1]} : vector<8x64xf32> to vector<8x1xf32>
    %c44 = arith.constant 44 : index
    %420 = arith.index_cast %21 : i32 to index
    %421 = vector.load %arg5[%c44, %420] : memref<64x128xf32, #tpu.memory_space<vmem>>, vector<1x128xf32>
    %422 = vector.broadcast %419 : vector<8x1xf32> to vector<8x128xf32>
    %423 = vector.broadcast %421 : vector<1x128xf32> to vector<8x128xf32>
    %424 = arith.addf %422, %423 : vector<8x128xf32>
    %cst_61 = arith.constant 0.000000e+00 : f32
    %425 = vector.broadcast %cst_61 : f32 to vector<8x128xf32>
    %426 = arith.maximumf %424, %425 : vector<8x128xf32>
    %427 = arith.subf %418, %426 : vector<8x128xf32>
    %428 = vector.extract_strided_slice %17 {offsets = [0, 45], sizes = [8, 1], strides = [1, 1]} : vector<8x64xf32> to vector<8x1xf32>
    %c45 = arith.constant 45 : index
    %429 = arith.index_cast %21 : i32 to index
    %430 = vector.load %arg5[%c45, %429] : memref<64x128xf32, #tpu.memory_space<vmem>>, vector<1x128xf32>
    %431 = vector.broadcast %428 : vector<8x1xf32> to vector<8x128xf32>
    %432 = vector.broadcast %430 : vector<1x128xf32> to vector<8x128xf32>
    %433 = arith.addf %431, %432 : vector<8x128xf32>
    %cst_62 = arith.constant 0.000000e+00 : f32
    %434 = vector.broadcast %cst_62 : f32 to vector<8x128xf32>
    %435 = arith.maximumf %433, %434 : vector<8x128xf32>
    %436 = arith.subf %427, %435 : vector<8x128xf32>
    %437 = vector.extract_strided_slice %17 {offsets = [0, 46], sizes = [8, 1], strides = [1, 1]} : vector<8x64xf32> to vector<8x1xf32>
    %c46 = arith.constant 46 : index
    %438 = arith.index_cast %21 : i32 to index
    %439 = vector.load %arg5[%c46, %438] : memref<64x128xf32, #tpu.memory_space<vmem>>, vector<1x128xf32>
    %440 = vector.broadcast %437 : vector<8x1xf32> to vector<8x128xf32>
    %441 = vector.broadcast %439 : vector<1x128xf32> to vector<8x128xf32>
    %442 = arith.addf %440, %441 : vector<8x128xf32>
    %cst_63 = arith.constant 0.000000e+00 : f32
    %443 = vector.broadcast %cst_63 : f32 to vector<8x128xf32>
    %444 = arith.maximumf %442, %443 : vector<8x128xf32>
    %445 = arith.subf %436, %444 : vector<8x128xf32>
    %446 = vector.extract_strided_slice %17 {offsets = [0, 47], sizes = [8, 1], strides = [1, 1]} : vector<8x64xf32> to vector<8x1xf32>
    %c47 = arith.constant 47 : index
    %447 = arith.index_cast %21 : i32 to index
    %448 = vector.load %arg5[%c47, %447] : memref<64x128xf32, #tpu.memory_space<vmem>>, vector<1x128xf32>
    %449 = vector.broadcast %446 : vector<8x1xf32> to vector<8x128xf32>
    %450 = vector.broadcast %448 : vector<1x128xf32> to vector<8x128xf32>
    %451 = arith.addf %449, %450 : vector<8x128xf32>
    %cst_64 = arith.constant 0.000000e+00 : f32
    %452 = vector.broadcast %cst_64 : f32 to vector<8x128xf32>
    %453 = arith.maximumf %451, %452 : vector<8x128xf32>
    %454 = arith.subf %445, %453 : vector<8x128xf32>
    %455 = vector.extract_strided_slice %17 {offsets = [0, 48], sizes = [8, 1], strides = [1, 1]} : vector<8x64xf32> to vector<8x1xf32>
    %c48 = arith.constant 48 : index
    %456 = arith.index_cast %21 : i32 to index
    %457 = vector.load %arg5[%c48, %456] : memref<64x128xf32, #tpu.memory_space<vmem>>, vector<1x128xf32>
    %458 = vector.broadcast %455 : vector<8x1xf32> to vector<8x128xf32>
    %459 = vector.broadcast %457 : vector<1x128xf32> to vector<8x128xf32>
    %460 = arith.addf %458, %459 : vector<8x128xf32>
    %cst_65 = arith.constant 0.000000e+00 : f32
    %461 = vector.broadcast %cst_65 : f32 to vector<8x128xf32>
    %462 = arith.maximumf %460, %461 : vector<8x128xf32>
    %463 = arith.subf %454, %462 : vector<8x128xf32>
    %464 = vector.extract_strided_slice %17 {offsets = [0, 49], sizes = [8, 1], strides = [1, 1]} : vector<8x64xf32> to vector<8x1xf32>
    %c49 = arith.constant 49 : index
    %465 = arith.index_cast %21 : i32 to index
    %466 = vector.load %arg5[%c49, %465] : memref<64x128xf32, #tpu.memory_space<vmem>>, vector<1x128xf32>
    %467 = vector.broadcast %464 : vector<8x1xf32> to vector<8x128xf32>
    %468 = vector.broadcast %466 : vector<1x128xf32> to vector<8x128xf32>
    %469 = arith.addf %467, %468 : vector<8x128xf32>
    %cst_66 = arith.constant 0.000000e+00 : f32
    %470 = vector.broadcast %cst_66 : f32 to vector<8x128xf32>
    %471 = arith.maximumf %469, %470 : vector<8x128xf32>
    %472 = arith.subf %463, %471 : vector<8x128xf32>
    %473 = vector.extract_strided_slice %17 {offsets = [0, 50], sizes = [8, 1], strides = [1, 1]} : vector<8x64xf32> to vector<8x1xf32>
    %c50 = arith.constant 50 : index
    %474 = arith.index_cast %21 : i32 to index
    %475 = vector.load %arg5[%c50, %474] : memref<64x128xf32, #tpu.memory_space<vmem>>, vector<1x128xf32>
    %476 = vector.broadcast %473 : vector<8x1xf32> to vector<8x128xf32>
    %477 = vector.broadcast %475 : vector<1x128xf32> to vector<8x128xf32>
    %478 = arith.addf %476, %477 : vector<8x128xf32>
    %cst_67 = arith.constant 0.000000e+00 : f32
    %479 = vector.broadcast %cst_67 : f32 to vector<8x128xf32>
    %480 = arith.maximumf %478, %479 : vector<8x128xf32>
    %481 = arith.subf %472, %480 : vector<8x128xf32>
    %482 = vector.extract_strided_slice %17 {offsets = [0, 51], sizes = [8, 1], strides = [1, 1]} : vector<8x64xf32> to vector<8x1xf32>
    %c51 = arith.constant 51 : index
    %483 = arith.index_cast %21 : i32 to index
    %484 = vector.load %arg5[%c51, %483] : memref<64x128xf32, #tpu.memory_space<vmem>>, vector<1x128xf32>
    %485 = vector.broadcast %482 : vector<8x1xf32> to vector<8x128xf32>
    %486 = vector.broadcast %484 : vector<1x128xf32> to vector<8x128xf32>
    %487 = arith.addf %485, %486 : vector<8x128xf32>
    %cst_68 = arith.constant 0.000000e+00 : f32
    %488 = vector.broadcast %cst_68 : f32 to vector<8x128xf32>
    %489 = arith.maximumf %487, %488 : vector<8x128xf32>
    %490 = arith.subf %481, %489 : vector<8x128xf32>
    %491 = vector.extract_strided_slice %17 {offsets = [0, 52], sizes = [8, 1], strides = [1, 1]} : vector<8x64xf32> to vector<8x1xf32>
    %c52 = arith.constant 52 : index
    %492 = arith.index_cast %21 : i32 to index
    %493 = vector.load %arg5[%c52, %492] : memref<64x128xf32, #tpu.memory_space<vmem>>, vector<1x128xf32>
    %494 = vector.broadcast %491 : vector<8x1xf32> to vector<8x128xf32>
    %495 = vector.broadcast %493 : vector<1x128xf32> to vector<8x128xf32>
    %496 = arith.addf %494, %495 : vector<8x128xf32>
    %cst_69 = arith.constant 0.000000e+00 : f32
    %497 = vector.broadcast %cst_69 : f32 to vector<8x128xf32>
    %498 = arith.maximumf %496, %497 : vector<8x128xf32>
    %499 = arith.subf %490, %498 : vector<8x128xf32>
    %500 = vector.extract_strided_slice %17 {offsets = [0, 53], sizes = [8, 1], strides = [1, 1]} : vector<8x64xf32> to vector<8x1xf32>
    %c53 = arith.constant 53 : index
    %501 = arith.index_cast %21 : i32 to index
    %502 = vector.load %arg5[%c53, %501] : memref<64x128xf32, #tpu.memory_space<vmem>>, vector<1x128xf32>
    %503 = vector.broadcast %500 : vector<8x1xf32> to vector<8x128xf32>
    %504 = vector.broadcast %502 : vector<1x128xf32> to vector<8x128xf32>
    %505 = arith.addf %503, %504 : vector<8x128xf32>
    %cst_70 = arith.constant 0.000000e+00 : f32
    %506 = vector.broadcast %cst_70 : f32 to vector<8x128xf32>
    %507 = arith.maximumf %505, %506 : vector<8x128xf32>
    %508 = arith.subf %499, %507 : vector<8x128xf32>
    %509 = vector.extract_strided_slice %17 {offsets = [0, 54], sizes = [8, 1], strides = [1, 1]} : vector<8x64xf32> to vector<8x1xf32>
    %c54 = arith.constant 54 : index
    %510 = arith.index_cast %21 : i32 to index
    %511 = vector.load %arg5[%c54, %510] : memref<64x128xf32, #tpu.memory_space<vmem>>, vector<1x128xf32>
    %512 = vector.broadcast %509 : vector<8x1xf32> to vector<8x128xf32>
    %513 = vector.broadcast %511 : vector<1x128xf32> to vector<8x128xf32>
    %514 = arith.addf %512, %513 : vector<8x128xf32>
    %cst_71 = arith.constant 0.000000e+00 : f32
    %515 = vector.broadcast %cst_71 : f32 to vector<8x128xf32>
    %516 = arith.maximumf %514, %515 : vector<8x128xf32>
    %517 = arith.subf %508, %516 : vector<8x128xf32>
    %518 = vector.extract_strided_slice %17 {offsets = [0, 55], sizes = [8, 1], strides = [1, 1]} : vector<8x64xf32> to vector<8x1xf32>
    %c55 = arith.constant 55 : index
    %519 = arith.index_cast %21 : i32 to index
    %520 = vector.load %arg5[%c55, %519] : memref<64x128xf32, #tpu.memory_space<vmem>>, vector<1x128xf32>
    %521 = vector.broadcast %518 : vector<8x1xf32> to vector<8x128xf32>
    %522 = vector.broadcast %520 : vector<1x128xf32> to vector<8x128xf32>
    %523 = arith.addf %521, %522 : vector<8x128xf32>
    %cst_72 = arith.constant 0.000000e+00 : f32
    %524 = vector.broadcast %cst_72 : f32 to vector<8x128xf32>
    %525 = arith.maximumf %523, %524 : vector<8x128xf32>
    %526 = arith.subf %517, %525 : vector<8x128xf32>
    %527 = vector.extract_strided_slice %17 {offsets = [0, 56], sizes = [8, 1], strides = [1, 1]} : vector<8x64xf32> to vector<8x1xf32>
    %c56 = arith.constant 56 : index
    %528 = arith.index_cast %21 : i32 to index
    %529 = vector.load %arg5[%c56, %528] : memref<64x128xf32, #tpu.memory_space<vmem>>, vector<1x128xf32>
    %530 = vector.broadcast %527 : vector<8x1xf32> to vector<8x128xf32>
    %531 = vector.broadcast %529 : vector<1x128xf32> to vector<8x128xf32>
    %532 = arith.addf %530, %531 : vector<8x128xf32>
    %cst_73 = arith.constant 0.000000e+00 : f32
    %533 = vector.broadcast %cst_73 : f32 to vector<8x128xf32>
    %534 = arith.maximumf %532, %533 : vector<8x128xf32>
    %535 = arith.subf %526, %534 : vector<8x128xf32>
    %536 = vector.extract_strided_slice %17 {offsets = [0, 57], sizes = [8, 1], strides = [1, 1]} : vector<8x64xf32> to vector<8x1xf32>
    %c57 = arith.constant 57 : index
    %537 = arith.index_cast %21 : i32 to index
    %538 = vector.load %arg5[%c57, %537] : memref<64x128xf32, #tpu.memory_space<vmem>>, vector<1x128xf32>
    %539 = vector.broadcast %536 : vector<8x1xf32> to vector<8x128xf32>
    %540 = vector.broadcast %538 : vector<1x128xf32> to vector<8x128xf32>
    %541 = arith.addf %539, %540 : vector<8x128xf32>
    %cst_74 = arith.constant 0.000000e+00 : f32
    %542 = vector.broadcast %cst_74 : f32 to vector<8x128xf32>
    %543 = arith.maximumf %541, %542 : vector<8x128xf32>
    %544 = arith.subf %535, %543 : vector<8x128xf32>
    %545 = vector.extract_strided_slice %17 {offsets = [0, 58], sizes = [8, 1], strides = [1, 1]} : vector<8x64xf32> to vector<8x1xf32>
    %c58 = arith.constant 58 : index
    %546 = arith.index_cast %21 : i32 to index
    %547 = vector.load %arg5[%c58, %546] : memref<64x128xf32, #tpu.memory_space<vmem>>, vector<1x128xf32>
    %548 = vector.broadcast %545 : vector<8x1xf32> to vector<8x128xf32>
    %549 = vector.broadcast %547 : vector<1x128xf32> to vector<8x128xf32>
    %550 = arith.addf %548, %549 : vector<8x128xf32>
    %cst_75 = arith.constant 0.000000e+00 : f32
    %551 = vector.broadcast %cst_75 : f32 to vector<8x128xf32>
    %552 = arith.maximumf %550, %551 : vector<8x128xf32>
    %553 = arith.subf %544, %552 : vector<8x128xf32>
    %554 = vector.extract_strided_slice %17 {offsets = [0, 59], sizes = [8, 1], strides = [1, 1]} : vector<8x64xf32> to vector<8x1xf32>
    %c59 = arith.constant 59 : index
    %555 = arith.index_cast %21 : i32 to index
    %556 = vector.load %arg5[%c59, %555] : memref<64x128xf32, #tpu.memory_space<vmem>>, vector<1x128xf32>
    %557 = vector.broadcast %554 : vector<8x1xf32> to vector<8x128xf32>
    %558 = vector.broadcast %556 : vector<1x128xf32> to vector<8x128xf32>
    %559 = arith.addf %557, %558 : vector<8x128xf32>
    %cst_76 = arith.constant 0.000000e+00 : f32
    %560 = vector.broadcast %cst_76 : f32 to vector<8x128xf32>
    %561 = arith.maximumf %559, %560 : vector<8x128xf32>
    %562 = arith.subf %553, %561 : vector<8x128xf32>
    %563 = vector.extract_strided_slice %17 {offsets = [0, 60], sizes = [8, 1], strides = [1, 1]} : vector<8x64xf32> to vector<8x1xf32>
    %c60 = arith.constant 60 : index
    %564 = arith.index_cast %21 : i32 to index
    %565 = vector.load %arg5[%c60, %564] : memref<64x128xf32, #tpu.memory_space<vmem>>, vector<1x128xf32>
    %566 = vector.broadcast %563 : vector<8x1xf32> to vector<8x128xf32>
    %567 = vector.broadcast %565 : vector<1x128xf32> to vector<8x128xf32>
    %568 = arith.addf %566, %567 : vector<8x128xf32>
    %cst_77 = arith.constant 0.000000e+00 : f32
    %569 = vector.broadcast %cst_77 : f32 to vector<8x128xf32>
    %570 = arith.maximumf %568, %569 : vector<8x128xf32>
    %571 = arith.subf %562, %570 : vector<8x128xf32>
    %572 = vector.extract_strided_slice %17 {offsets = [0, 61], sizes = [8, 1], strides = [1, 1]} : vector<8x64xf32> to vector<8x1xf32>
    %c61 = arith.constant 61 : index
    %573 = arith.index_cast %21 : i32 to index
    %574 = vector.load %arg5[%c61, %573] : memref<64x128xf32, #tpu.memory_space<vmem>>, vector<1x128xf32>
    %575 = vector.broadcast %572 : vector<8x1xf32> to vector<8x128xf32>
    %576 = vector.broadcast %574 : vector<1x128xf32> to vector<8x128xf32>
    %577 = arith.addf %575, %576 : vector<8x128xf32>
    %cst_78 = arith.constant 0.000000e+00 : f32
    %578 = vector.broadcast %cst_78 : f32 to vector<8x128xf32>
    %579 = arith.maximumf %577, %578 : vector<8x128xf32>
    %580 = arith.subf %571, %579 : vector<8x128xf32>
    %581 = vector.extract_strided_slice %17 {offsets = [0, 62], sizes = [8, 1], strides = [1, 1]} : vector<8x64xf32> to vector<8x1xf32>
    %c62 = arith.constant 62 : index
    %582 = arith.index_cast %21 : i32 to index
    %583 = vector.load %arg5[%c62, %582] : memref<64x128xf32, #tpu.memory_space<vmem>>, vector<1x128xf32>
    %584 = vector.broadcast %581 : vector<8x1xf32> to vector<8x128xf32>
    %585 = vector.broadcast %583 : vector<1x128xf32> to vector<8x128xf32>
    %586 = arith.addf %584, %585 : vector<8x128xf32>
    %cst_79 = arith.constant 0.000000e+00 : f32
    %587 = vector.broadcast %cst_79 : f32 to vector<8x128xf32>
    %588 = arith.maximumf %586, %587 : vector<8x128xf32>
    %589 = arith.subf %580, %588 : vector<8x128xf32>
    %590 = vector.extract_strided_slice %17 {offsets = [0, 63], sizes = [8, 1], strides = [1, 1]} : vector<8x64xf32> to vector<8x1xf32>
    %c63 = arith.constant 63 : index
    %591 = arith.index_cast %21 : i32 to index
    %592 = vector.load %arg5[%c63, %591] : memref<64x128xf32, #tpu.memory_space<vmem>>, vector<1x128xf32>
    %593 = vector.broadcast %590 : vector<8x1xf32> to vector<8x128xf32>
    %594 = vector.broadcast %592 : vector<1x128xf32> to vector<8x128xf32>
    %595 = arith.addf %593, %594 : vector<8x128xf32>
    %cst_80 = arith.constant 0.000000e+00 : f32
    %596 = vector.broadcast %cst_80 : f32 to vector<8x128xf32>
    %597 = arith.maximumf %595, %596 : vector<8x128xf32>
    %598 = arith.subf %589, %597 : vector<8x128xf32>
    %599 = vector.broadcast %11 : f32 to vector<8x128xf32>
    %600 = arith.addf %598, %599 : vector<8x128xf32>
    %cst_81 = arith.constant 2.000000e+00 : f32
    %601 = vector.broadcast %cst_81 : f32 to vector<8x128xf32>
    %602 = arith.mulf %600, %601 : vector<8x128xf32>
    %cst_82 = arith.constant -1.500000e+01 : f32
    %cst_83 = arith.constant 1.500000e+01 : f32
    %603 = vector.broadcast %cst_82 : f32 to vector<8x128xf32>
    %604 = arith.maximumf %603, %602 : vector<8x128xf32>
    %605 = vector.broadcast %cst_83 : f32 to vector<8x128xf32>
    %606 = arith.minimumf %605, %604 : vector<8x128xf32>
    %607 = math.exp %606 : vector<8x128xf32>
    %608 = arith.index_cast %15 : i32 to index
    %609 = arith.index_cast %21 : i32 to index
    %610 = vector.load %arg8[%608, %609] : memref<8x128xf32, #tpu.memory_space<vmem>>, vector<8x128xf32>
    tpu.vector_store %arg8[%608, %609], %607 {strides = array<i32>} : memref<8x128xf32, #tpu.memory_space<vmem>>, vector<8x128xf32>,
    %c1_i32_84 = arith.constant 1 : i32
    %c1_i32_85 = arith.constant 1 : i32
    return
  }
  func.func @transform_0(%arg0: i32, %arg1: i32) -> (i32, i32) {
    %c0_i32 = arith.constant 0 : i32
    %c0_i32_0 = arith.constant 0 : i32
    return %arg0, %c0_i32 : i32, i32
  }
  func.func @transform_1(%arg0: i32, %arg1: i32) -> (i32, i32) {
    %c0_i32 = arith.constant 0 : i32
    %c0_i32_0 = arith.constant 0 : i32
    return %c0_i32, %arg1 : i32, i32
  }
  func.func @transform_2(%arg0: i32, %arg1: i32) -> (i32, i32) {
    %c0_i32 = arith.constant 0 : i32
    %c0_i32_0 = arith.constant 0 : i32
    return %arg0, %c0_i32 : i32, i32
  }
  func.func @transform_3(%arg0: i32, %arg1: i32) -> (i32, i32) {
    %c0_i32 = arith.constant 0 : i32
    %c0_i32_0 = arith.constant 0 : i32
    return %c0_i32, %arg1 : i32, i32
  }
  func.func @transform_4(%arg0: i32, %arg1: i32) -> (i32, i32) {
    %c0_i32 = arith.constant 0 : i32
    %c0_i32_0 = arith.constant 0 : i32
    %c0_i32_1 = arith.constant 0 : i32
    return %c0_i32, %c0_i32_0 : i32, i32
  }
  func.func @transform_5(%arg0: i32, %arg1: i32) -> (i32, i32) {
    %c0_i32 = arith.constant 0 : i32
    return %arg0, %arg1 : i32, i32
  }
  func.func @transform_6(%arg0: i32, %arg1: i32) -> (i32, i32) {
    %c0_i32 = arith.constant 0 : i32
    return %arg0, %arg1 : i32, i32
  }
}

</mosaic_0001>

<llo_original>
// kernel: tpu_custom_call.1
$region0: #{tpu_custom_call.1}
  #allocation0 [shape = 'u32[]', space=smem, size = 0x4, offset = 0x4, fixed_abs, tag = 'smem constant byte address 0x4 - core index']
  #allocation1 [shape = 'u32[144,128]{1,0:T(1,128)}', space=vmem, size = 0x12000, scoped, tag = 'internal scratch']
  #allocation2 [shape = 'f32[1,1]{1,0:T(1,128)S(6)}', space=smem, size = 0x200, scoped, tag = 'scoped memory for tpu_custom_call.1']
  %s0 = inlined_call_operand.hbm [shape: bf16[8,32], index: 0, kind: input, shape index: {}]
  %s1 = inlined_call_operand.hbm [shape: bf16[32,128], index: 1, kind: input, shape index: {}]
  %s2 = inlined_call_operand.vmem [shape: f32[8,64], index: 2, kind: input, shape index: {}]
  %s3 = inlined_call_operand.hbm [shape: f32[64,128], index: 3, kind: input, shape index: {}]
  %s4 = inlined_call_operand.<no memory space> [shape: f32[1,1], index: 4, kind: input, shape index: {}]
  %s5 = inlined_call_operand.hbm [shape: f32[8,128], index: 5, kind: output, shape index: {0}]
  %s6 = inlined_call_operand.hbm [shape: f32[8,128], index: 6, kind: output, shape index: {1}]
  %7 = xla_tuple %s5, %s6
  %s8 = sld [smem:[#allocation0]]
  $region50: #{tpu_custom_call.1} parent=0
    _
  %s10 = ssub.s32 1, %s8
  %s11 = scalar_select 0, %s10, %s8
  %12 = sst [smem:[#allocation2]] %s4
  $region1: #{tpu_custom_call.1} parent=0
    #allocation3 [shape = 'u8[2048]{0}', space=vmem, size = 0x800, scoped, tag = 'input window, operand 0, single buffered']
    #allocation4 [shape = 's32[1]{0}', space=sflag, size = 0x4, scoped, tag = 'scoped memory for tpu_custom_call.1']
    #allocation5 [shape = 's32[1]{0}', space=sflag, size = 0x4, scoped, tag = 'scoped memory for tpu_custom_call.1']
    #allocation6 [shape = 'u8[8192]{0}', space=vmem, size = 0x2000, scoped, tag = 'input window, operand 1, single buffered']
    #allocation7 [shape = 's32[1]{0}', space=sflag, size = 0x4, scoped, tag = 'scoped memory for tpu_custom_call.1']
    #allocation8 [shape = 'u8[32768]{0}', space=vmem, size = 0x8000, scoped, tag = 'input window, operand 3, single buffered']
    #allocation9 [shape = 'u8[4096]{0}', space=vmem, size = 0x1000, scoped, tag = 'output window, operand 0, single buffered']
    #allocation10 [shape = 'u8[4096]{0}', space=vmem, size = 0x1000, scoped, tag = 'output window, operand 1, single buffered']
    #allocation11 [shape = 's32[1]{0}', space=sflag, size = 0x4, scoped, tag = 'scoped memory for tpu_custom_call.1']
    %13 = vsyncpa [#allocation4], 0
    %14 = vsyncpa [#allocation7], 0
    %15 = vsyncpa [#allocation5], 0
    %16 = vsyncpa [#allocation11], 0
    // Predicated region
    $region2: #{tpu_custom_call.1} parent=1 // pred_check
      _
    $region3: #{tpu_custom_call.1} parent=1 // pred_check_branch
      %18 = sbr.rel (0) target = $region5
    $region4: #{tpu_custom_call.1} parent=1 // pred_region
      %s20 = ssub.s32 64, 64
      %21 = vsyncadd [#allocation4], %s20
      %s23 = sshll.u32 [#allocation3], 4
      %s24 = int_to_ptr.vmem [resolvable:$true] %s23
      %26 = dma.hbm_to_vmem [thread:$0]  %s0, 64, %s24, [#allocation4]
    $region5: #{tpu_custom_call.1} parent=1 // pred_fallthru
      _
    // Predicated region
    $region6: #{tpu_custom_call.1} parent=1 // pred_check
      _
    $region7: #{tpu_custom_call.1} parent=1 // pred_check_branch
      %28 = sbr.rel (0) target = $region9
    $region8: #{tpu_custom_call.1} parent=1 // pred_region
      %s30 = ssub.s32 256, 256
      %31 = vsyncadd [#allocation7], %s30
      %s32 = sshll.u32 [#allocation6], 4
      %s33 = int_to_ptr.vmem [resolvable:$true] %s32
      %38 = dma.hbm_to_vmem [thread:$0]  %s1, 256, %s33, [#allocation7], 64, 64, 4
    $region9: #{tpu_custom_call.1} parent=1 // pred_fallthru
      _
    // Predicated region
    $region10: #{tpu_custom_call.1} parent=1 // pred_check
      _
    $region11: #{tpu_custom_call.1} parent=1 // pred_check_branch
      %40 = sbr.rel (0) target = $region13
    $region12: #{tpu_custom_call.1} parent=1 // pred_region
      _
    $region13: #{tpu_custom_call.1} parent=1 // pred_fallthru
      _
    // Predicated region
    $region14: #{tpu_custom_call.1} parent=1 // pred_check
      _
    $region15: #{tpu_custom_call.1} parent=1 // pred_check_branch
      %42 = sbr.rel (0) target = $region17
    $region16: #{tpu_custom_call.1} parent=1 // pred_region
      %s44 = ssub.s32 1024, 1024
      %45 = vsyncadd [#allocation7], %s44
      %s46 = sshll.u32 [#allocation8], 4
      %s47 = int_to_ptr.vmem [resolvable:$true] %s46
      %52 = dma.hbm_to_vmem [thread:$0]  %s3, 1024, %s47, [#allocation7], 128, 128, 8
    $region17: #{tpu_custom_call.1} parent=1 // pred_fallthru
      _
    // Predicated region
    $region18: #{tpu_custom_call.1} parent=1 // pred_check
      _
    $region19: #{tpu_custom_call.1} parent=1 // pred_check_branch
      %54 = sbr.rel (0) target = $region21
    $region20: #{tpu_custom_call.1} parent=1 // pred_region
      _
    $region21: #{tpu_custom_call.1} parent=1 // pred_fallthru
      _
    // Predicated region
    $region22: #{tpu_custom_call.1} parent=1 // pred_check
      _
    $region23: #{tpu_custom_call.1} parent=1 // pred_check_branch
      %56 = sbr.rel (0) target = $region25
    $region24: #{tpu_custom_call.1} parent=1 // pred_region
      %57 = dma.done [#allocation4], 64
    $region25: #{tpu_custom_call.1} parent=1 // pred_fallthru
      _
    // Predicated region
    $region26: #{tpu_custom_call.1} parent=1 // pred_check
      _
    $region27: #{tpu_custom_call.1} parent=1 // pred_check_branch
      %59 = sbr.rel (0) target = $region29
    $region28: #{tpu_custom_call.1} parent=1 // pred_region
      %60 = dma.done [#allocation7], 256
    $region29: #{tpu_custom_call.1} parent=1 // pred_fallthru
      _
    // Predicated region
    $region30: #{tpu_custom_call.1} parent=1 // pred_check
      _
    $region31: #{tpu_custom_call.1} parent=1 // pred_check_branch
      %62 = sbr.rel (0) target = $region33
    $region32: #{tpu_custom_call.1} parent=1 // pred_region
      %63 = dma.done [#allocation7], 1024
    $region33: #{tpu_custom_call.1} parent=1 // pred_fallthru
      _
    %v65 = vld [vmem:[#allocation3] sm:$0xf]
    %v66 = vld [vmem:[#allocation6] sm:$0xf]
    %v67 = vld [vmem:[#allocation6 + $0x4] sm:$0xf]
    %v68 = vld [vmem:[#allocation6 + $0x8] sm:$0xf]
    %v69 = vld [vmem:[#allocation6 + $0xc] sm:$0xf]
    %v74 = vunpack.c.l.b16 %v66
    %v75 = vunpack.c.l.b16 %v67
    %v76 = vunpack.c.l.b16 %v68
    %v77 = vunpack.c.l.b16 %v69
    %v78 = vpack.c.b16 %v75, %v74
    %v79 = vpack.c.b16 %v77, %v76
    %vm82 = vcmask 261120
    %v84 = vsel %vm82, %v65, 0
    %86 = vmatprep.subr.bf16.mxu0 0
    %87 = vmatpush1.bf16.msra.mxu0 %v78
    %88 = vmatprep.subr.bf16.mxu0 0
    %89 = vmatpush1.bf16.msra.mxu0 %v79
    %90 = vmatprep.subr.bf16.mxu0 0
    %91 = vmatpush1.bf16.msra.mxu0 0
    %92 = vmatprep.subr.bf16.mxu0 0
    %93 = vmatpush1.bf16.msra.mxu0 0
    %94 = vmatprep.subr.bf16.mxu0 0
    %95 = vmatpush1.bf16.msra.mxu0 0
    %96 = vmatprep.subr.bf16.mxu0 0
    %97 = vmatpush1.bf16.msra.mxu0 0
    %98 = vmatprep.subr.bf16.mxu0 0
    %99 = vmatpush1.bf16.msra.mxu0 0
    %100 = vmatprep.subr.bf16.mxu0 0
    %101 = vmatpush1.bf16.msra.mxu0 0
    %102 = vmatprep.subr.bf16.mxu0 0
    %103 = vmatpush1.bf16.msra.mxu0 0
    %104 = vmatprep.subr.bf16.mxu0 0
    %105 = vmatpush1.bf16.msra.mxu0 0
    %106 = vmatprep.subr.bf16.mxu0 0
    %107 = vmatpush1.bf16.msra.mxu0 0
    %108 = vmatprep.subr.bf16.mxu0 0
    %109 = vmatpush1.bf16.msra.mxu0 0
    %110 = vmatprep.subr.bf16.mxu0 0
    %111 = vmatpush1.bf16.msra.mxu0 0
    %112 = vmatprep.subr.bf16.mxu0 0
    %113 = vmatpush1.bf16.msra.mxu0 0
    %114 = vmatprep.subr.bf16.mxu0 0
    %115 = vmatpush1.bf16.msra.mxu0 0
    %116 = vmatprep.subr.bf16.mxu0 0
    %117 = vmatpush1.bf16.msra.mxu0 0
    %118 = vmatprep.mubr.bf16.mxu0 0
    %119 = vmatmul.mubr.bf16.gmra.mrb[0].mxu0 %v84
    %v120 = vpop.f32.mrb[0].mxu0
    %v121 = vadd.f32 0.0, %v120
    %v122 = vpop.f32.mrb[0].mxu0
    %v123 = vpop.f32.mrb[0].mxu0
    %v124 = vpop.f32.mrb[0].mxu0
    %125 = vdwg.mxu0
    %v126 = vmul.f32 %v121, 0.0625
    %v127 = vmax.f32 %v126, -15.0
    %v128 = vmin.f32 %v127, 15.0
    %v129 = vmul.f32 %v128, 1.442695
    %v130 = vpow.pop %v129
    %131 = vst [vmem:[#allocation9] sm:$0xff] %v130
    %s132 = sld [smem:[#allocation2]]
    %v133 = vld [vmem:[%s2] sm:$0xff]
    %v134 = vld [vmem:[#allocation8] sm:$0x1]
    %136 = vset.pattern.permute.xlu0 0
    %137 = vperm.xlu0 %136, %v133
    %v138 = vpop.permute.xlu0 %137
    %v140 = vlaneseq
    %v141 = vshrl.u32 %v140, 7
    %v142 = vsub.s32 0, %v141
    %v143 = vrot.slane %v134, %v142
    %v144 = vadd.f32 %v138, %v143
    %v145 = vmax.f32 %v144, 0.0
    %v146 = vadd.f32 %v145, 0.0
    %v147 = vld [vmem:[#allocation8 + $0x1] sm:$0x1]
    %148 = vset.pattern.permute.xlu0 1
    %149 = vperm.xlu0 %148, %v133
    %v150 = vpop.permute.xlu0 %149
    %v152 = vlaneseq
    %v153 = vshrl.u32 %v152, 7
    %v154 = vsub.s32 0, %v153
    %v155 = vrot.slane %v147, %v154
    %v156 = vadd.f32 %v150, %v155
    %v157 = vmax.f32 %v156, 0.0
    %v158 = vadd.f32 %v146, %v157
    %v159 = vld [vmem:[#allocation8 + $0x2] sm:$0x1]
    %160 = vset.pattern.permute.xlu0 2
    %161 = vperm.xlu0 %160, %v133
    %v162 = vpop.permute.xlu0 %161
    %v164 = vlaneseq
    %v165 = vshrl.u32 %v164, 7
    %v166 = vsub.s32 0, %v165
    %v167 = vrot.slane %v159, %v166
    %v168 = vadd.f32 %v162, %v167
    %v169 = vmax.f32 %v168, 0.0
    %v170 = vadd.f32 %v158, %v169
    %v171 = vld [vmem:[#allocation8 + $0x3] sm:$0x1]
    %172 = vset.pattern.permute.xlu0 3
    %173 = vperm.xlu0 %172, %v133
    %v174 = vpop.permute.xlu0 %173
    %v176 = vlaneseq
    %v177 = vshrl.u32 %v176, 7
    %v178 = vsub.s32 0, %v177
    %v179 = vrot.slane %v171, %v178
    %v180 = vadd.f32 %v174, %v179
    %v181 = vmax.f32 %v180, 0.0
    %v182 = vadd.f32 %v170, %v181
    %v183 = vld [vmem:[#allocation8 + $0x4] sm:$0x1]
    %184 = vset.pattern.permute.xlu0 4
    %185 = vperm.xlu0 %184, %v133
    %v186 = vpop.permute.xlu0 %185
    %v188 = vlaneseq
    %v189 = vshrl.u32 %v188, 7
    %v190 = vsub.s32 0, %v189
    %v191 = vrot.slane %v183, %v190
    %v192 = vadd.f32 %v186, %v191
    %v193 = vmax.f32 %v192, 0.0
    %v194 = vadd.f32 %v182, %v193
    %v195 = vld [vmem:[#allocation8 + $0x5] sm:$0x1]
    %196 = vset.pattern.permute.xlu0 5
    %197 = vperm.xlu0 %196, %v133
    %v198 = vpop.permute.xlu0 %197
    %v200 = vlaneseq
    %v201 = vshrl.u32 %v200, 7
    %v202 = vsub.s32 0, %v201
    %v203 = vrot.slane %v195, %v202
    %v204 = vadd.f32 %v198, %v203
    %v205 = vmax.f32 %v204, 0.0
    %v206 = vadd.f32 %v194, %v205
    %v207 = vld [vmem:[#allocation8 + $0x6] sm:$0x1]
    %208 = vset.pattern.permute.xlu0 6
    %209 = vperm.xlu0 %208, %v133
    %v210 = vpop.permute.xlu0 %209
    %v212 = vlaneseq
    %v213 = vshrl.u32 %v212, 7
    %v214 = vsub.s32 0, %v213
    %v215 = vrot.slane %v207, %v214
    %v216 = vadd.f32 %v210, %v215
    %v217 = vmax.f32 %v216, 0.0
    %v218 = vadd.f32 %v206, %v217
    %v219 = vld [vmem:[#allocation8 + $0x7] sm:$0x1]
    %220 = vset.pattern.permute.xlu0 7
    %221 = vperm.xlu0 %220, %v133
    %v222 = vpop.permute.xlu0 %221
    %v224 = vlaneseq
    %v225 = vshrl.u32 %v224, 7
    %v226 = vsub.s32 0, %v225
    %v227 = vrot.slane %v219, %v226
    %v228 = vadd.f32 %v222, %v227
    %v229 = vmax.f32 %v228, 0.0
    %v230 = vadd.f32 %v218, %v229
    %v231 = vld [vmem:[#allocation8 + $0x8] sm:$0x1]
    %232 = vset.pattern.permute.xlu0 8
    %233 = vperm.xlu0 %232, %v133
    %v234 = vpop.permute.xlu0 %233
    %v236 = vlaneseq
    %v237 = vshrl.u32 %v236, 7
    %v238 = vsub.s32 0, %v237
    %v239 = vrot.slane %v231, %v238
    %v240 = vadd.f32 %v234, %v239
    %v241 = vmax.f32 %v240, 0.0
    %v242 = vadd.f32 %v230, %v241
    %v243 = vld [vmem:[#allocation8 + $0x9] sm:$0x1]
    %244 = vset.pattern.permute.xlu0 9
    %245 = vperm.xlu0 %244, %v133
    %v246 = vpop.permute.xlu0 %245
    %v248 = vlaneseq
    %v249 = vshrl.u32 %v248, 7
    %v250 = vsub.s32 0, %v249
    %v251 = vrot.slane %v243, %v250
    %v252 = vadd.f32 %v246, %v251
    %v253 = vmax.f32 %v252, 0.0
    %v254 = vadd.f32 %v242, %v253
    %v255 = vld [vmem:[#allocation8 + $0xa] sm:$0x1]
    %256 = vset.pattern.permute.xlu0 10
    %257 = vperm.xlu0 %256, %v133
    %v258 = vpop.permute.xlu0 %257
    %v260 = vlaneseq
    %v261 = vshrl.u32 %v260, 7
    %v262 = vsub.s32 0, %v261
    %v263 = vrot.slane %v255, %v262
    %v264 = vadd.f32 %v258, %v263
    %v265 = vmax.f32 %v264, 0.0
    %v266 = vadd.f32 %v254, %v265
    %v267 = vld [vmem:[#allocation8 + $0xb] sm:$0x1]
    %268 = vset.pattern.permute.xlu0 11
    %269 = vperm.xlu0 %268, %v133
    %v270 = vpop.permute.xlu0 %269
    %v272 = vlaneseq
    %v273 = vshrl.u32 %v272, 7
    %v274 = vsub.s32 0, %v273
    %v275 = vrot.slane %v267, %v274
    %v276 = vadd.f32 %v270, %v275
    %v277 = vmax.f32 %v276, 0.0
    %v278 = vadd.f32 %v266, %v277
    %v279 = vld [vmem:[#allocation8 + $0xc] sm:$0x1]
    %280 = vset.pattern.permute.xlu0 12
    %281 = vperm.xlu0 %280, %v133
    %v282 = vpop.permute.xlu0 %281
    %v284 = vlaneseq
    %v285 = vshrl.u32 %v284, 7
    %v286 = vsub.s32 0, %v285
    %v287 = vrot.slane %v279, %v286
    %v288 = vadd.f32 %v282, %v287
    %v289 = vmax.f32 %v288, 0.0
    %v290 = vadd.f32 %v278, %v289
    %v291 = vld [vmem:[#allocation8 + $0xd] sm:$0x1]
    %292 = vset.pattern.permute.xlu0 13
    %293 = vperm.xlu0 %292, %v133
    %v294 = vpop.permute.xlu0 %293
    %v296 = vlaneseq
    %v297 = vshrl.u32 %v296, 7
    %v298 = vsub.s32 0, %v297
    %v299 = vrot.slane %v291, %v298
    %v300 = vadd.f32 %v294, %v299
    %v301 = vmax.f32 %v300, 0.0
    %v302 = vadd.f32 %v290, %v301
    %v303 = vld [vmem:[#allocation8 + $0xe] sm:$0x1]
    %304 = vset.pattern.permute.xlu0 14
    %305 = vperm.xlu0 %304, %v133
    %v306 = vpop.permute.xlu0 %305
    %v308 = vlaneseq
    %v309 = vshrl.u32 %v308, 7
    %v310 = vsub.s32 0, %v309
    %v311 = vrot.slane %v303, %v310
    %v312 = vadd.f32 %v306, %v311
    %v313 = vmax.f32 %v312, 0.0
    %v314 = vadd.f32 %v302, %v313
    %v315 = vld [vmem:[#allocation8 + $0xf] sm:$0x1]
    %316 = vset.pattern.permute.xlu0 15
    %317 = vperm.xlu0 %316, %v133
    %v318 = vpop.permute.xlu0 %317
    %v320 = vlaneseq
    %v321 = vshrl.u32 %v320, 7
    %v322 = vsub.s32 0, %v321
    %v323 = vrot.slane %v315, %v322
    %v324 = vadd.f32 %v318, %v323
    %v325 = vmax.f32 %v324, 0.0
    %v326 = vadd.f32 %v314, %v325
    %v327 = vld [vmem:[#allocation8 + $0x10] sm:$0x1]
    %328 = vset.pattern.permute.xlu0 16
    %329 = vperm.xlu0 %328, %v133
    %v330 = vpop.permute.xlu0 %329
    %v332 = vlaneseq
    %v333 = vshrl.u32 %v332, 7
    %v334 = vsub.s32 0, %v333
    %v335 = vrot.slane %v327, %v334
    %v336 = vadd.f32 %v330, %v335
    %v337 = vmax.f32 %v336, 0.0
    %v338 = vadd.f32 %v326, %v337
    %v339 = vld [vmem:[#allocation8 + $0x11] sm:$0x1]
    %340 = vset.pattern.permute.xlu0 17
    %341 = vperm.xlu0 %340, %v133
    %v342 = vpop.permute.xlu0 %341
    %v344 = vlaneseq
    %v345 = vshrl.u32 %v344, 7
    %v346 = vsub.s32 0, %v345
    %v347 = vrot.slane %v339, %v346
    %v348 = vadd.f32 %v342, %v347
    %v349 = vmax.f32 %v348, 0.0
    %v350 = vadd.f32 %v338, %v349
    %v351 = vld [vmem:[#allocation8 + $0x12] sm:$0x1]
    %352 = vset.pattern.permute.xlu0 18
    %353 = vperm.xlu0 %352, %v133
    %v354 = vpop.permute.xlu0 %353
    %v356 = vlaneseq
    %v357 = vshrl.u32 %v356, 7
    %v358 = vsub.s32 0, %v357
    %v359 = vrot.slane %v351, %v358
    %v360 = vadd.f32 %v354, %v359
    %v361 = vmax.f32 %v360, 0.0
    %v362 = vadd.f32 %v350, %v361
    %v363 = vld [vmem:[#allocation8 + $0x13] sm:$0x1]
    %364 = vset.pattern.permute.xlu0 19
    %365 = vperm.xlu0 %364, %v133
    %v366 = vpop.permute.xlu0 %365
    %v368 = vlaneseq
    %v369 = vshrl.u32 %v368, 7
    %v370 = vsub.s32 0, %v369
    %v371 = vrot.slane %v363, %v370
    %v372 = vadd.f32 %v366, %v371
    %v373 = vmax.f32 %v372, 0.0
    %v374 = vadd.f32 %v362, %v373
    %v375 = vld [vmem:[#allocation8 + $0x14] sm:$0x1]
    %376 = vset.pattern.permute.xlu0 20
    %377 = vperm.xlu0 %376, %v133
    %v378 = vpop.permute.xlu0 %377
    %v380 = vlaneseq
    %v381 = vshrl.u32 %v380, 7
    %v382 = vsub.s32 0, %v381
    %v383 = vrot.slane %v375, %v382
    %v384 = vadd.f32 %v378, %v383
    %v385 = vmax.f32 %v384, 0.0
    %v386 = vadd.f32 %v374, %v385
    %v387 = vld [vmem:[#allocation8 + $0x15] sm:$0x1]
    %388 = vset.pattern.permute.xlu0 21
    %389 = vperm.xlu0 %388, %v133
    %v390 = vpop.permute.xlu0 %389
    %v392 = vlaneseq
    %v393 = vshrl.u32 %v392, 7
    %v394 = vsub.s32 0, %v393
    %v395 = vrot.slane %v387, %v394
    %v396 = vadd.f32 %v390, %v395
    %v397 = vmax.f32 %v396, 0.0
    %v398 = vadd.f32 %v386, %v397
    %v399 = vld [vmem:[#allocation8 + $0x16] sm:$0x1]
    %400 = vset.pattern.permute.xlu0 22
    %401 = vperm.xlu0 %400, %v133
    %v402 = vpop.permute.xlu0 %401
    %v404 = vlaneseq
    %v405 = vshrl.u32 %v404, 7
    %v406 = vsub.s32 0, %v405
    %v407 = vrot.slane %v399, %v406
    %v408 = vadd.f32 %v402, %v407
    %v409 = vmax.f32 %v408, 0.0
    %v410 = vadd.f32 %v398, %v409
    %v411 = vld [vmem:[#allocation8 + $0x17] sm:$0x1]
    %412 = vset.pattern.permute.xlu0 23
    %413 = vperm.xlu0 %412, %v133
    %v414 = vpop.permute.xlu0 %413
    %v416 = vlaneseq
    %v417 = vshrl.u32 %v416, 7
    %v418 = vsub.s32 0, %v417
    %v419 = vrot.slane %v411, %v418
    %v420 = vadd.f32 %v414, %v419
    %v421 = vmax.f32 %v420, 0.0
    %v422 = vadd.f32 %v410, %v421
    %v423 = vld [vmem:[#allocation8 + $0x18] sm:$0x1]
    %424 = vset.pattern.permute.xlu0 24
    %425 = vperm.xlu0 %424, %v133
    %v426 = vpop.permute.xlu0 %425
    %v428 = vlaneseq
    %v429 = vshrl.u32 %v428, 7
    %v430 = vsub.s32 0, %v429
    %v431 = vrot.slane %v423, %v430
    %v432 = vadd.f32 %v426, %v431
    %v433 = vmax.f32 %v432, 0.0
    %v434 = vadd.f32 %v422, %v433
    %v435 = vld [vmem:[#allocation8 + $0x19] sm:$0x1]
    %436 = vset.pattern.permute.xlu0 25
    %437 = vperm.xlu0 %436, %v133
    %v438 = vpop.permute.xlu0 %437
    %v440 = vlaneseq
    %v441 = vshrl.u32 %v440, 7
    %v442 = vsub.s32 0, %v441
    %v443 = vrot.slane %v435, %v442
    %v444 = vadd.f32 %v438, %v443
    %v445 = vmax.f32 %v444, 0.0
    %v446 = vadd.f32 %v434, %v445
    %v447 = vld [vmem:[#allocation8 + $0x1a] sm:$0x1]
    %448 = vset.pattern.permute.xlu0 26
    %449 = vperm.xlu0 %448, %v133
    %v450 = vpop.permute.xlu0 %449
    %v452 = vlaneseq
    %v453 = vshrl.u32 %v452, 7
    %v454 = vsub.s32 0, %v453
    %v455 = vrot.slane %v447, %v454
    %v456 = vadd.f32 %v450, %v455
    %v457 = vmax.f32 %v456, 0.0
    %v458 = vadd.f32 %v446, %v457
    %v459 = vld [vmem:[#allocation8 + $0x1b] sm:$0x1]
    %460 = vset.pattern.permute.xlu0 27
    %461 = vperm.xlu0 %460, %v133
    %v462 = vpop.permute.xlu0 %461
    %v464 = vlaneseq
    %v465 = vshrl.u32 %v464, 7
    %v466 = vsub.s32 0, %v465
    %v467 = vrot.slane %v459, %v466
    %v468 = vadd.f32 %v462, %v467
    %v469 = vmax.f32 %v468, 0.0
    %v470 = vsub.f32 %v458, %v469
    %v471 = vld [vmem:[#allocation8 + $0x1c] sm:$0x1]
    %472 = vset.pattern.permute.xlu0 28
    %473 = vperm.xlu0 %472, %v133
    %v474 = vpop.permute.xlu0 %473
    %v476 = vlaneseq
    %v477 = vshrl.u32 %v476, 7
    %v478 = vsub.s32 0, %v477
    %v479 = vrot.slane %v471, %v478
    %v480 = vadd.f32 %v474, %v479
    %v481 = vmax.f32 %v480, 0.0
    %v482 = vsub.f32 %v470, %v481
    %v483 = vld [vmem:[#allocation8 + $0x1d] sm:$0x1]
    %484 = vset.pattern.permute.xlu0 29
    %485 = vperm.xlu0 %484, %v133
    %v486 = vpop.permute.xlu0 %485
    %v488 = vlaneseq
    %v489 = vshrl.u32 %v488, 7
    %v490 = vsub.s32 0, %v489
    %v491 = vrot.slane %v483, %v490
    %v492 = vadd.f32 %v486, %v491
    %v493 = vmax.f32 %v492, 0.0
    %v494 = vsub.f32 %v482, %v493
    %v495 = vld [vmem:[#allocation8 + $0x1e] sm:$0x1]
    %496 = vset.pattern.permute.xlu0 30
    %497 = vperm.xlu0 %496, %v133
    %v498 = vpop.permute.xlu0 %497
    %v500 = vlaneseq
    %v501 = vshrl.u32 %v500, 7
    %v502 = vsub.s32 0, %v501
    %v503 = vrot.slane %v495, %v502
    %v504 = vadd.f32 %v498, %v503
    %v505 = vmax.f32 %v504, 0.0
    %v506 = vsub.f32 %v494, %v505
    %v507 = vld [vmem:[#allocation8 + $0x1f] sm:$0x1]
    %508 = vset.pattern.permute.xlu0 31
    %509 = vperm.xlu0 %508, %v133
    %v510 = vpop.permute.xlu0 %509
    %v512 = vlaneseq
    %v513 = vshrl.u32 %v512, 7
    %v514 = vsub.s32 0, %v513
    %v515 = vrot.slane %v507, %v514
    %v516 = vadd.f32 %v510, %v515
    %v517 = vmax.f32 %v516, 0.0
    %v518 = vsub.f32 %v506, %v517
    %v519 = vld [vmem:[#allocation8 + $0x20] sm:$0x1]
    %520 = vset.pattern.permute.xlu0 32
    %521 = vperm.xlu0 %520, %v133
    %v522 = vpop.permute.xlu0 %521
    %v524 = vlaneseq
    %v525 = vshrl.u32 %v524, 7
    %v526 = vsub.s32 0, %v525
    %v527 = vrot.slane %v519, %v526
    %v528 = vadd.f32 %v522, %v527
    %v529 = vmax.f32 %v528, 0.0
    %v530 = vsub.f32 %v518, %v529
    %v531 = vld [vmem:[#allocation8 + $0x21] sm:$0x1]
    %532 = vset.pattern.permute.xlu0 33
    %533 = vperm.xlu0 %532, %v133
    %v534 = vpop.permute.xlu0 %533
    %v536 = vlaneseq
    %v537 = vshrl.u32 %v536, 7
    %v538 = vsub.s32 0, %v537
    %v539 = vrot.slane %v531, %v538
    %v540 = vadd.f32 %v534, %v539
    %v541 = vmax.f32 %v540, 0.0
    %v542 = vsub.f32 %v530, %v541
    %v543 = vld [vmem:[#allocation8 + $0x22] sm:$0x1]
    %544 = vset.pattern.permute.xlu0 34
    %545 = vperm.xlu0 %544, %v133
    %v546 = vpop.permute.xlu0 %545
    %v548 = vlaneseq
    %v549 = vshrl.u32 %v548, 7
    %v550 = vsub.s32 0, %v549
    %v551 = vrot.slane %v543, %v550
    %v552 = vadd.f32 %v546, %v551
    %v553 = vmax.f32 %v552, 0.0
    %v554 = vsub.f32 %v542, %v553
    %v555 = vld [vmem:[#allocation8 + $0x23] sm:$0x1]
    %556 = vset.pattern.permute.xlu0 35
    %557 = vperm.xlu0 %556, %v133
    %v558 = vpop.permute.xlu0 %557
    %v560 = vlaneseq
    %v561 = vshrl.u32 %v560, 7
    %v562 = vsub.s32 0, %v561
    %v563 = vrot.slane %v555, %v562
    %v564 = vadd.f32 %v558, %v563
    %v565 = vmax.f32 %v564, 0.0
    %v566 = vsub.f32 %v554, %v565
    %v567 = vld [vmem:[#allocation8 + $0x24] sm:$0x1]
    %568 = vset.pattern.permute.xlu0 36
    %569 = vperm.xlu0 %568, %v133
    %v570 = vpop.permute.xlu0 %569
    %v572 = vlaneseq
    %v573 = vshrl.u32 %v572, 7
    %v574 = vsub.s32 0, %v573
    %v575 = vrot.slane %v567, %v574
    %v576 = vadd.f32 %v570, %v575
    %v577 = vmax.f32 %v576, 0.0
    %v578 = vsub.f32 %v566, %v577
    %v579 = vld [vmem:[#allocation8 + $0x25] sm:$0x1]
    %580 = vset.pattern.permute.xlu0 37
    %581 = vperm.xlu0 %580, %v133
    %v582 = vpop.permute.xlu0 %581
    %v584 = vlaneseq
    %v585 = vshrl.u32 %v584, 7
    %v586 = vsub.s32 0, %v585
    %v587 = vrot.slane %v579, %v586
    %v588 = vadd.f32 %v582, %v587
    %v589 = vmax.f32 %v588, 0.0
    %v590 = vsub.f32 %v578, %v589
    %v591 = vld [vmem:[#allocation8 + $0x26] sm:$0x1]
    %592 = vset.pattern.permute.xlu0 38
    %593 = vperm.xlu0 %592, %v133
    %v594 = vpop.permute.xlu0 %593
    %v596 = vlaneseq
    %v597 = vshrl.u32 %v596, 7
    %v598 = vsub.s32 0, %v597
    %v599 = vrot.slane %v591, %v598
    %v600 = vadd.f32 %v594, %v599
    %v601 = vmax.f32 %v600, 0.0
    %v602 = vsub.f32 %v590, %v601
    %v603 = vld [vmem:[#allocation8 + $0x27] sm:$0x1]
    %604 = vset.pattern.permute.xlu0 39
    %605 = vperm.xlu0 %604, %v133
    %v606 = vpop.permute.xlu0 %605
    %v608 = vlaneseq
    %v609 = vshrl.u32 %v608, 7
    %v610 = vsub.s32 0, %v609
    %v611 = vrot.slane %v603, %v610
    %v612 = vadd.f32 %v606, %v611
    %v613 = vmax.f32 %v612, 0.0
    %v614 = vsub.f32 %v602, %v613
    %v615 = vld [vmem:[#allocation8 + $0x28] sm:$0x1]
    %616 = vset.pattern.permute.xlu0 40
    %617 = vperm.xlu0 %616, %v133
    %v618 = vpop.permute.xlu0 %617
    %v620 = vlaneseq
    %v621 = vshrl.u32 %v620, 7
    %v622 = vsub.s32 0, %v621
    %v623 = vrot.slane %v615, %v622
    %v624 = vadd.f32 %v618, %v623
    %v625 = vmax.f32 %v624, 0.0
    %v626 = vsub.f32 %v614, %v625
    %v627 = vld [vmem:[#allocation8 + $0x29] sm:$0x1]
    %628 = vset.pattern.permute.xlu0 41
    %629 = vperm.xlu0 %628, %v133
    %v630 = vpop.permute.xlu0 %629
    %v632 = vlaneseq
    %v633 = vshrl.u32 %v632, 7
    %v634 = vsub.s32 0, %v633
    %v635 = vrot.slane %v627, %v634
    %v636 = vadd.f32 %v630, %v635
    %v637 = vmax.f32 %v636, 0.0
    %v638 = vsub.f32 %v626, %v637
    %v639 = vld [vmem:[#allocation8 + $0x2a] sm:$0x1]
    %640 = vset.pattern.permute.xlu0 42
    %641 = vperm.xlu0 %640, %v133
    %v642 = vpop.permute.xlu0 %641
    %v644 = vlaneseq
    %v645 = vshrl.u32 %v644, 7
    %v646 = vsub.s32 0, %v645
    %v647 = vrot.slane %v639, %v646
    %v648 = vadd.f32 %v642, %v647
    %v649 = vmax.f32 %v648, 0.0
    %v650 = vsub.f32 %v638, %v649
    %v651 = vld [vmem:[#allocation8 + $0x2b] sm:$0x1]
    %652 = vset.pattern.permute.xlu0 43
    %653 = vperm.xlu0 %652, %v133
    %v654 = vpop.permute.xlu0 %653
    %v656 = vlaneseq
    %v657 = vshrl.u32 %v656, 7
    %v658 = vsub.s32 0, %v657
    %v659 = vrot.slane %v651, %v658
    %v660 = vadd.f32 %v654, %v659
    %v661 = vmax.f32 %v660, 0.0
    %v662 = vsub.f32 %v650, %v661
    %v663 = vld [vmem:[#allocation8 + $0x2c] sm:$0x1]
    %664 = vset.pattern.permute.xlu0 44
    %665 = vperm.xlu0 %664, %v133
    %v666 = vpop.permute.xlu0 %665
    %v668 = vlaneseq
    %v669 = vshrl.u32 %v668, 7
    %v670 = vsub.s32 0, %v669
    %v671 = vrot.slane %v663, %v670
    %v672 = vadd.f32 %v666, %v671
    %v673 = vmax.f32 %v672, 0.0
    %v674 = vsub.f32 %v662, %v673
    %v675 = vld [vmem:[#allocation8 + $0x2d] sm:$0x1]
    %676 = vset.pattern.permute.xlu0 45
    %677 = vperm.xlu0 %676, %v133
    %v678 = vpop.permute.xlu0 %677
    %v680 = vlaneseq
    %v681 = vshrl.u32 %v680, 7
    %v682 = vsub.s32 0, %v681
    %v683 = vrot.slane %v675, %v682
    %v684 = vadd.f32 %v678, %v683
    %v685 = vmax.f32 %v684, 0.0
    %v686 = vsub.f32 %v674, %v685
    %v687 = vld [vmem:[#allocation8 + $0x2e] sm:$0x1]
    %688 = vset.pattern.permute.xlu0 46
    %689 = vperm.xlu0 %688, %v133
    %v690 = vpop.permute.xlu0 %689
    %v692 = vlaneseq
    %v693 = vshrl.u32 %v692, 7
    %v694 = vsub.s32 0, %v693
    %v695 = vrot.slane %v687, %v694
    %v696 = vadd.f32 %v690, %v695
    %v697 = vmax.f32 %v696, 0.0
    %v698 = vsub.f32 %v686, %v697
    %v699 = vld [vmem:[#allocation8 + $0x2f] sm:$0x1]
    %700 = vset.pattern.permute.xlu0 47
    %701 = vperm.xlu0 %700, %v133
    %v702 = vpop.permute.xlu0 %701
    %v704 = vlaneseq
    %v705 = vshrl.u32 %v704, 7
    %v706 = vsub.s32 0, %v705
    %v707 = vrot.slane %v699, %v706
    %v708 = vadd.f32 %v702, %v707
    %v709 = vmax.f32 %v708, 0.0
    %v710 = vsub.f32 %v698, %v709
    %v711 = vld [vmem:[#allocation8 + $0x30] sm:$0x1]
    %712 = vset.pattern.permute.xlu0 48
    %713 = vperm.xlu0 %712, %v133
    %v714 = vpop.permute.xlu0 %713
    %v716 = vlaneseq
    %v717 = vshrl.u32 %v716, 7
    %v718 = vsub.s32 0, %v717
    %v719 = vrot.slane %v711, %v718
    %v720 = vadd.f32 %v714, %v719
    %v721 = vmax.f32 %v720, 0.0
    %v722 = vsub.f32 %v710, %v721
    %v723 = vld [vmem:[#allocation8 + $0x31] sm:$0x1]
    %724 = vset.pattern.permute.xlu0 49
    %725 = vperm.xlu0 %724, %v133
    %v726 = vpop.permute.xlu0 %725
    %v728 = vlaneseq
    %v729 = vshrl.u32 %v728, 7
    %v730 = vsub.s32 0, %v729
    %v731 = vrot.slane %v723, %v730
    %v732 = vadd.f32 %v726, %v731
    %v733 = vmax.f32 %v732, 0.0
    %v734 = vsub.f32 %v722, %v733
    %v735 = vld [vmem:[#allocation8 + $0x32] sm:$0x1]
    %736 = vset.pattern.permute.xlu0 50
    %737 = vperm.xlu0 %736, %v133
    %v738 = vpop.permute.xlu0 %737
    %v740 = vlaneseq
    %v741 = vshrl.u32 %v740, 7
    %v742 = vsub.s32 0, %v741
    %v743 = vrot.slane %v735, %v742
    %v744 = vadd.f32 %v738, %v743
    %v745 = vmax.f32 %v744, 0.0
    %v746 = vsub.f32 %v734, %v745
    %v747 = vld [vmem:[#allocation8 + $0x33] sm:$0x1]
    %748 = vset.pattern.permute.xlu0 51
    %749 = vperm.xlu0 %748, %v133
    %v750 = vpop.permute.xlu0 %749
    %v752 = vlaneseq
    %v753 = vshrl.u32 %v752, 7
    %v754 = vsub.s32 0, %v753
    %v755 = vrot.slane %v747, %v754
    %v756 = vadd.f32 %v750, %v755
    %v757 = vmax.f32 %v756, 0.0
    %v758 = vsub.f32 %v746, %v757
    %v759 = vld [vmem:[#allocation8 + $0x34] sm:$0x1]
    %760 = vset.pattern.permute.xlu0 52
    %761 = vperm.xlu0 %760, %v133
    %v762 = vpop.permute.xlu0 %761
    %v764 = vlaneseq
    %v765 = vshrl.u32 %v764, 7
    %v766 = vsub.s32 0, %v765
    %v767 = vrot.slane %v759, %v766
    %v768 = vadd.f32 %v762, %v767
    %v769 = vmax.f32 %v768, 0.0
    %v770 = vsub.f32 %v758, %v769
    %v771 = vld [vmem:[#allocation8 + $0x35] sm:$0x1]
    %772 = vset.pattern.permute.xlu0 53
    %773 = vperm.xlu0 %772, %v133
    %v774 = vpop.permute.xlu0 %773
    %v776 = vlaneseq
    %v777 = vshrl.u32 %v776, 7
    %v778 = vsub.s32 0, %v777
    %v779 = vrot.slane %v771, %v778
    %v780 = vadd.f32 %v774, %v779
    %v781 = vmax.f32 %v780, 0.0
    %v782 = vsub.f32 %v770, %v781
    %v783 = vld [vmem:[#allocation8 + $0x36] sm:$0x1]
    %784 = vset.pattern.permute.xlu0 54
    %785 = vperm.xlu0 %784, %v133
    %v786 = vpop.permute.xlu0 %785
    %v788 = vlaneseq
    %v789 = vshrl.u32 %v788, 7
    %v790 = vsub.s32 0, %v789
    %v791 = vrot.slane %v783, %v790
    %v792 = vadd.f32 %v786, %v791
    %v793 = vmax.f32 %v792, 0.0
    %v794 = vsub.f32 %v782, %v793
    %v795 = vld [vmem:[#allocation8 + $0x37] sm:$0x1]
    %796 = vset.pattern.permute.xlu0 55
    %797 = vperm.xlu0 %796, %v133
    %v798 = vpop.permute.xlu0 %797
    %v800 = vlaneseq
    %v801 = vshrl.u32 %v800, 7
    %v802 = vsub.s32 0, %v801
    %v803 = vrot.slane %v795, %v802
    %v804 = vadd.f32 %v798, %v803
    %v805 = vmax.f32 %v804, 0.0
    %v806 = vsub.f32 %v794, %v805
    %v807 = vld [vmem:[#allocation8 + $0x38] sm:$0x1]
    %808 = vset.pattern.permute.xlu0 56
    %809 = vperm.xlu0 %808, %v133
    %v810 = vpop.permute.xlu0 %809
    %v812 = vlaneseq
    %v813 = vshrl.u32 %v812, 7
    %v814 = vsub.s32 0, %v813
    %v815 = vrot.slane %v807, %v814
    %v816 = vadd.f32 %v810, %v815
    %v817 = vmax.f32 %v816, 0.0
    %v818 = vsub.f32 %v806, %v817
    %v819 = vld [vmem:[#allocation8 + $0x39] sm:$0x1]
    %820 = vset.pattern.permute.xlu0 57
    %821 = vperm.xlu0 %820, %v133
    %v822 = vpop.permute.xlu0 %821
    %v824 = vlaneseq
    %v825 = vshrl.u32 %v824, 7
    %v826 = vsub.s32 0, %v825
    %v827 = vrot.slane %v819, %v826
    %v828 = vadd.f32 %v822, %v827
    %v829 = vmax.f32 %v828, 0.0
    %v830 = vsub.f32 %v818, %v829
    %v831 = vld [vmem:[#allocation8 + $0x3a] sm:$0x1]
    %832 = vset.pattern.permute.xlu0 58
    %833 = vperm.xlu0 %832, %v133
    %v834 = vpop.permute.xlu0 %833
    %v836 = vlaneseq
    %v837 = vshrl.u32 %v836, 7
    %v838 = vsub.s32 0, %v837
    %v839 = vrot.slane %v831, %v838
    %v840 = vadd.f32 %v834, %v839
    %v841 = vmax.f32 %v840, 0.0
    %v842 = vsub.f32 %v830, %v841
    %v843 = vld [vmem:[#allocation8 + $0x3b] sm:$0x1]
    %844 = vset.pattern.permute.xlu0 59
    %845 = vperm.xlu0 %844, %v133
    %v846 = vpop.permute.xlu0 %845
    %v848 = vlaneseq
    %v849 = vshrl.u32 %v848, 7
    %v850 = vsub.s32 0, %v849
    %v851 = vrot.slane %v843, %v850
    %v852 = vadd.f32 %v846, %v851
    %v853 = vmax.f32 %v852, 0.0
    %v854 = vsub.f32 %v842, %v853
    %v855 = vld [vmem:[#allocation8 + $0x3c] sm:$0x1]
    %856 = vset.pattern.permute.xlu0 60
    %857 = vperm.xlu0 %856, %v133
    %v858 = vpop.permute.xlu0 %857
    %v860 = vlaneseq
    %v861 = vshrl.u32 %v860, 7
    %v862 = vsub.s32 0, %v861
    %v863 = vrot.slane %v855, %v862
    %v864 = vadd.f32 %v858, %v863
    %v865 = vmax.f32 %v864, 0.0
    %v866 = vsub.f32 %v854, %v865
    %v867 = vld [vmem:[#allocation8 + $0x3d] sm:$0x1]
    %868 = vset.pattern.permute.xlu0 61
    %869 = vperm.xlu0 %868, %v133
    %v870 = vpop.permute.xlu0 %869
    %v872 = vlaneseq
    %v873 = vshrl.u32 %v872, 7
    %v874 = vsub.s32 0, %v873
    %v875 = vrot.slane %v867, %v874
    %v876 = vadd.f32 %v870, %v875
    %v877 = vmax.f32 %v876, 0.0
    %v878 = vsub.f32 %v866, %v877
    %v879 = vld [vmem:[#allocation8 + $0x3e] sm:$0x1]
    %880 = vset.pattern.permute.xlu0 62
    %881 = vperm.xlu0 %880, %v133
    %v882 = vpop.permute.xlu0 %881
    %v884 = vlaneseq
    %v885 = vshrl.u32 %v884, 7
    %v886 = vsub.s32 0, %v885
    %v887 = vrot.slane %v879, %v886
    %v888 = vadd.f32 %v882, %v887
    %v889 = vmax.f32 %v888, 0.0
    %v890 = vsub.f32 %v878, %v889
    %v891 = vld [vmem:[#allocation8 + $0x3f] sm:$0x1]
    %892 = vset.pattern.permute.xlu0 63
    %893 = vperm.xlu0 %892, %v133
    %v894 = vpop.permute.xlu0 %893
    %v896 = vlaneseq
    %v897 = vshrl.u32 %v896, 7
    %v898 = vsub.s32 0, %v897
    %v899 = vrot.slane %v891, %v898
    %v900 = vadd.f32 %v894, %v899
    %v901 = vmax.f32 %v900, 0.0
    %v902 = vsub.f32 %v890, %v901
    %v903 = vstv %s132
    %v904 = vadd.f32 %v902, %v903
    %v905 = vmul.f32 %v904, 2.0
    %v906 = vmax.f32 %v905, -15.0
    %v907 = vmin.f32 %v906, 15.0
    %v908 = vmul.f32 %v907, 1.442695
    %v909 = vpow.pop %v908
    %s910 = sadd.s32 0, 0
    %s911 = scalar_lea.vmem [#allocation10], %s910
    %912 = vst [vmem:[%s911] sm:$0xff] %v909
    // Predicated region
    $region34: #{tpu_custom_call.1} parent=1 // pred_check
      _
    $region35: #{tpu_custom_call.1} parent=1 // pred_check_branch
      %914 = sbr.rel (0) target = $region37
    $region36: #{tpu_custom_call.1} parent=1 // pred_region
      %s916 = ssub.s32 128, 128
      %917 = vsyncadd [#allocation5], %s916
      %s919 = sshll.u32 [#allocation9], 4
      %s920 = int_to_ptr.vmem [resolvable:$true] %s919
      %922 = dma.vmem_to_hbm [thread:$0]  %s920, 128, %s5, [#allocation5]
    $region37: #{tpu_custom_call.1} parent=1 // pred_fallthru
      _
    // Predicated region
    $region38: #{tpu_custom_call.1} parent=1 // pred_check
      _
    $region39: #{tpu_custom_call.1} parent=1 // pred_check_branch
      %924 = sbr.rel (0) target = $region41
    $region40: #{tpu_custom_call.1} parent=1 // pred_region
      %s926 = ssub.s32 128, 128
      %927 = vsyncadd [#allocation11], %s926
      %s929 = sshll.u32 [#allocation10], 4
      %s930 = int_to_ptr.vmem [resolvable:$true] %s929
      %932 = dma.vmem_to_hbm [thread:$0]  %s930, 128, %s6, [#allocation11]
    $region41: #{tpu_custom_call.1} parent=1 // pred_fallthru
      _
    // Predicated region
    $region42: #{tpu_custom_call.1} parent=1 // pred_check
      _
    $region43: #{tpu_custom_call.1} parent=1 // pred_check_branch
      %934 = sbr.rel (0) target = $region45
    $region44: #{tpu_custom_call.1} parent=1 // pred_region
      %935 = dma.done [#allocation5], 128
    $region45: #{tpu_custom_call.1} parent=1 // pred_fallthru
      _
    // Predicated region
    $region46: #{tpu_custom_call.1} parent=1 // pred_check
      _
    $region47: #{tpu_custom_call.1} parent=1 // pred_check_branch
      %937 = sbr.rel (0) target = $region49
    $region48: #{tpu_custom_call.1} parent=1 // pred_region
      %938 = dma.done [#allocation11], 128
    $region49: #{tpu_custom_call.1} parent=1 // pred_fallthru
      _
    %939 = vsyncpa [#allocation4], 1
    %940 = vsyncpa [#allocation7], 1
    %941 = vsyncpa [#allocation5], 1
    %942 = vsyncpa [#allocation11], 1

</llo_original>
